<compile_context>
chip_gen: v7x
topology: tpu7x:2x2x1
jax: 0.10.0
libtpu: 0.0.40
codegen_flags: <defaults>
</compile_context>

<pallas_src>
import functools
import math

import jax
import jax.numpy as jnp
from jax import lax
from jax.experimental import pallas as pl
from jax.experimental.pallas import tpu as pltpu

EPS = 1e-6
LANE = 128


def _round_up(v, m):
    return (v + m - 1) // m * m


def _layernorm_masked(z, alpha, beta, mask, inv_d):
    # z's padded lanes are exactly zero; statistics use only the real width.
    mean = jnp.sum(z, axis=-1, keepdims=True) * inv_d
    diff = jnp.where(mask, z - mean, 0.0)
    var = jnp.sum(diff * diff, axis=-1, keepdims=True) * inv_d
    return alpha * diff * lax.rsqrt(var + EPS) + beta


def transformer_kernel(
    x_ref, wqkv_ref, bqkv_ref, wo_ref, ob_ref, a1_ref, b1_ref,
    w1_ref, fb1_ref, w2_ref, fb2_ref, a2_ref, b2_ref, o_ref,
    *, h, d_k, d_model, d_pad, tile_n,
):
    dt = wqkv_ref.dtype                      # matmul operand dtype (f32 or bf16)
    scale = 1.0 / math.sqrt(d_k)
    inv_d = 1.0 / d_model

    row0 = pl.multiple_of(pl.program_id(0) * tile_n, tile_n)
    x_full = x_ref[...]                              # [n, d_pad]  (f32, resident)
    x_tile = x_ref[pl.ds(row0, tile_n), :]           # [tile_n, d_pad]

    # ---- projections (fused QKV weight; Q per tile, K|V over full seq) ----
    q = jnp.dot(x_tile.astype(dt), wqkv_ref[:, 0:d_pad],
                preferred_element_type=jnp.float32) + bqkv_ref[:, 0:d_pad]
    kv = jnp.dot(x_full.astype(dt), wqkv_ref[:, d_pad:3 * d_pad],
                 preferred_element_type=jnp.float32) + bqkv_ref[:, d_pad:3 * d_pad]
    k = kv[:, 0:d_pad]
    v = kv[:, d_pad:2 * d_pad]

    # ---- multi-head attention; accumulate Wo projection per head ----
    mha = jnp.zeros((tile_n, d_pad), jnp.float32)
    for i in range(h):                               # static head loop
        lo, hi = i * d_k, (i + 1) * d_k
        q_h = (q[:, lo:hi] * scale).astype(dt)       # [tile_n, d_k]
        k_h = k[:, lo:hi].astype(dt)                 # [n, d_k]
        v_h = v[:, lo:hi].astype(dt)                 # [n, d_k]
        # scores: contract on shared d_k axis (no XLU transpose of K)
        s = lax.dot_general(q_h, k_h, (((1,), (1,)), ((), ())),
                            preferred_element_type=jnp.float32)   # [tile_n, n]
        s = s - jnp.max(s, axis=-1, keepdims=True)
        p = jnp.exp(s)                               # f32 softmax numerics
        denom = jnp.sum(p, axis=-1, keepdims=True)
        r = pl.reciprocal(denom, approx=True)        # EUP vrcp (free slot)
        r = r * (2.0 - denom * r)                    # one Newton step -> ~exact
        o_h = jnp.dot(p.astype(dt), v_h,
                      preferred_element_type=jnp.float32) * r     # [tile_n, d_k]
        # accumulate through the sublane-aligned Wo row-slice (no lane concat)
        mha = mha + jnp.dot(o_h.astype(dt), wo_ref[lo:hi, :],
                            preferred_element_type=jnp.float32)
    mha = mha + ob_ref[...]

    lane = lax.broadcasted_iota(jnp.int32, (tile_n, d_pad), 1)
    mask = lane < d_model                            # real-feature lane mask

    y = _layernorm_masked(x_tile + mha, a1_ref[...], b1_ref[...], mask, inv_d)

    # ---- feed-forward ----
    ff = jnp.dot(y.astype(dt), w1_ref[...],
                 preferred_element_type=jnp.float32) + fb1_ref[...]
    ff = jnp.maximum(ff, 0.0)
    ff = jnp.dot(ff.astype(dt), w2_ref[...],
                 preferred_element_type=jnp.float32) + fb2_ref[...]

    o_ref[...] = _layernorm_masked(y + ff, a2_ref[...], b2_ref[...], mask, inv_d)


def transformer_forward(x, n, d_model, h, wq, q_bias, wk, k_bias, wv, v_bias,
                        wo, o_bias, alpha_1, beta_1, w1, bias_1, w2, bias_2,
                        alpha_2, beta_2, *, matmul_dtype=jnp.float32):
    assert d_model % h == 0
    d_k = d_model // h
    d_ff = w1.shape[1]
    d_pad = _round_up(d_model, LANE)
    f_pad = _round_up(d_ff, LANE)

    # Sequence tile: queries / FFN / LN are row-wise; K/V stay full-resident.
    # (For very long sequences a flash-style (q_tile, kv_tile) grid would be
    #  used instead; at these sizes full K/V residency is the right tradeoff.)
    tile_n = min(n, 128)
    assert n % tile_n == 0 and tile_n % 8 == 0, "n must be a multiple of 8"

    f32 = jnp.float32

    def pad2(a, rows, cols):
        return jnp.pad(a, ((0, rows - a.shape[0]), (0, cols - a.shape[1])))

    def padrow(vec, cols):
        vec = vec.reshape(1, -1)
        return jnp.pad(vec, ((0, 0), (0, cols - vec.shape[1])))

    x_p = pad2(x.astype(f32), n, d_pad)
    # Fused QKV weight: each projection padded into its own 128-aligned block.
    wqkv = jnp.concatenate(
        [pad2(w.astype(matmul_dtype), d_pad, d_pad) for w in (wq, wk, wv)], axis=1)
    bqkv = jnp.concatenate(
        [padrow(b.astype(f32), d_pad) for b in (q_bias, k_bias, v_bias)], axis=1)

    args = (
        x_p, wqkv, bqkv,
        pad2(wo.astype(matmul_dtype), d_pad, d_pad),
        padrow(o_bias.astype(f32), d_pad),
        padrow(alpha_1.astype(f32), d_pad), padrow(beta_1.astype(f32), d_pad),
        pad2(w1.astype(matmul_dtype), d_pad, f_pad),
        padrow(bias_1.astype(f32), f_pad),
        pad2(w2.astype(matmul_dtype), f_pad, d_pad),
        padrow(bias_2.astype(f32), d_pad),
        padrow(alpha_2.astype(f32), d_pad), padrow(beta_2.astype(f32), d_pad),
    )

    def resident(shape):  # VMEM-resident across all sequence tiles
        return pl.BlockSpec(shape, lambda i: (0,) * len(shape))

    in_specs = [
        resident((n, d_pad)),            # x (full sequence, for K/V + residual)
        resident((d_pad, 3 * d_pad)),    # fused Wq|Wk|Wv
        resident((1, 3 * d_pad)),        # fused q|k|v bias
        resident((d_pad, d_pad)),        # Wo
        resident((1, d_pad)),            # o bias
        resident((1, d_pad)),            # alpha_1
        resident((1, d_pad)),            # beta_1
        resident((d_pad, f_pad)),        # W1
        resident((1, f_pad)),            # bias_1
        resident((f_pad, d_pad)),        # W2
        resident((1, d_pad)),            # bias_2
        resident((1, d_pad)),            # alpha_2
        resident((1, d_pad)),            # beta_2
    ]

    out_p = pl.pallas_call(
        functools.partial(transformer_kernel, h=h, d_k=d_k, d_model=d_model,
                          d_pad=d_pad, tile_n=tile_n),
        grid=(n // tile_n,),
        in_specs=in_specs,
        out_specs=pl.BlockSpec((tile_n, d_pad), lambda i: (i, 0)),
        out_shape=jax.ShapeDtypeStruct((n, d_pad), jnp.float32),
        compiler_params=pltpu.CompilerParams(
            dimension_semantics=("parallel",),        # v7x: 2 TCs split tiles
            vmem_limit_bytes=32 * 1024 * 1024,        # explicit, fits v7x VMEM
        ),
    )(*args)
    return out_p[:, :d_model]


# ---------------- pure-JAX reference (unpadded, f32) ----------------
def _layernorm_ref(x, alpha, beta):
    mean = jnp.mean(x, axis=-1, keepdims=True)
    var = jnp.mean((x - mean) ** 2, axis=-1, keepdims=True)
    return alpha * (x - mean) * lax.rsqrt(var + EPS) + beta


def transformer_reference(x, h, wq, qb, wk, kb, wv, vb, wo, ob, a1, b1,
                          w1, bias1, w2, bias2, a2, b2):
    n, d_model = x.shape
    d_k = d_model // h
    q = x @ wq + qb
    k = x @ wk + kb
    v = x @ wv + vb
    qh = q.reshape(n, h, d_k).transpose(1, 0, 2)
    kh = k.reshape(n, h, d_k).transpose(1, 0, 2)
    vh = v.reshape(n, h, d_k).transpose(1, 0, 2)
    s = jnp.einsum('hqd,hkd->hqk', qh, kh) / math.sqrt(d_k)
    p = jax.nn.softmax(s, axis=-1)
    attn = jnp.einsum('hqk,hkd->hqd', p, vh).transpose(1, 0, 2).reshape(n, d_model)
    mha = attn @ wo + ob
    y = _layernorm_ref(x + mha, a1, b1)
    ff = jnp.maximum(y @ w1 + bias1, 0.0) @ w2 + bias2
    return _layernorm_ref(y + ff, a2, b2)


if __name__ == "__main__":
    n, d_model, h, d_ff = 8, 32, 4, 64
    key = jax.random.PRNGKey(0)
    ks = jax.random.split(key, 12)

    x = jax.random.normal(ks[0], (n, d_model), jnp.float32)
    wq = jax.random.normal(ks[1], (d_model, d_model), jnp.float32) * 0.1
    wk = jax.random.normal(ks[2], (d_model, d_model), jnp.float32) * 0.1
    wv = jax.random.normal(ks[3], (d_model, d_model), jnp.float32) * 0.1
    wo = jax.random.normal(ks[4], (d_model, d_model), jnp.float32) * 0.1
    q_bias = jax.random.normal(ks[5], (d_model,), jnp.float32) * 0.1
    k_bias = jax.random.normal(ks[6], (d_model,), jnp.float32) * 0.1
    v_bias = jax.random.normal(ks[7], (d_model,), jnp.float32) * 0.1
    o_bias = jax.random.normal(ks[8], (d_model,), jnp.float32) * 0.1
    w1 = jax.random.normal(ks[9], (d_model, d_ff), jnp.float32) * 0.1
    bias_1 = jnp.zeros((d_ff,), jnp.float32)
    w2 = jax.random.normal(ks[10], (d_ff, d_model), jnp.float32) * 0.1
    bias_2 = jnp.zeros((d_model,), jnp.float32)
    alpha_1 = jnp.ones((d_model,), jnp.float32)
    beta_1 = jnp.zeros((d_model,), jnp.float32)
    alpha_2 = jnp.ones((d_model,), jnp.float32)
    beta_2 = jnp.zeros((d_model,), jnp.float32)

    ref = transformer_reference(x, h, wq, q_bias, wk, k_bias, wv, v_bias,
                                wo, o_bias, alpha_1, beta_1, w1, bias_1,
                                w2, bias_2, alpha_2, beta_2)

    # f32 MXU-operand path (strict tolerance, matches v5e guidance).
    out = transformer_forward(x, n, d_model, h, wq, q_bias, wk, k_bias, wv,
                              v_bias, wo, o_bias, alpha_1, beta_1, w1, bias_1,
                              w2, bias_2, alpha_2, beta_2,
                              matmul_dtype=jnp.float32)
    out = jax.block_until_ready(out)
    assert out.shape == (n, d_model)
    assert jnp.allclose(out, ref, atol=1e-4, rtol=1e-4), "f32 mismatch vs reference"

    # bf16 MXU-operand path (v6e/v7x recommendation); elementwise math stays f32.
    out_bf16 = transformer_forward(x, n, d_model, h, wq, q_bias, wk, k_bias, wv,
                                   v_bias, wo, o_bias, alpha_1, beta_1, w1,
                                   bias_1, w2, bias_2, alpha_2, beta_2,
                                   matmul_dtype=jnp.bfloat16)
    out_bf16 = jax.block_until_ready(out_bf16)
    assert jnp.allclose(out_bf16, ref, atol=5e-2, rtol=5e-2), "bf16 mismatch vs reference"

    print("KERNEL_OK")
</pallas_src>

<mosaic_0001>
module attributes {stable_mosaic.version = 11 : i64} {
  func.func @transformer_kernel(%arg0: i32, %arg1: memref<8x128xf32, #tpu.memory_space<vmem>>, %arg2: memref<128x384xf32, #tpu.memory_space<vmem>>, %arg3: memref<1x384xf32, #tpu.memory_space<vmem>>, %arg4: memref<128x128xf32, #tpu.memory_space<vmem>>, %arg5: memref<1x128xf32, #tpu.memory_space<vmem>>, %arg6: memref<1x128xf32, #tpu.memory_space<vmem>>, %arg7: memref<1x128xf32, #tpu.memory_space<vmem>>, %arg8: memref<128x128xf32, #tpu.memory_space<vmem>>, %arg9: memref<1x128xf32, #tpu.memory_space<vmem>>, %arg10: memref<128x128xf32, #tpu.memory_space<vmem>>, %arg11: memref<1x128xf32, #tpu.memory_space<vmem>>, %arg12: memref<1x128xf32, #tpu.memory_space<vmem>>, %arg13: memref<1x128xf32, #tpu.memory_space<vmem>>, %arg14: memref<8x128xf32, #tpu.memory_space<vmem>>) attributes {dimension_semantics = [#tpu.dimension_semantics<parallel>], iteration_bounds = array<i64: 1>, scalar_prefetch = 0 : i64, scratch_operands = 0 : i64, tpu.core_type = #tpu.core_type<tc>, window_params = [{pipeline_mode = #tpu.pipeline_mode<synchronous>, transform_indices = @transform_0, window_bounds = array<i64: 8, 128>}, {pipeline_mode = #tpu.pipeline_mode<synchronous>, transform_indices = @transform_1, window_bounds = array<i64: 128, 384>}, {pipeline_mode = #tpu.pipeline_mode<synchronous>, transform_indices = @transform_2, window_bounds = array<i64: 1, 384>}, {pipeline_mode = #tpu.pipeline_mode<synchronous>, transform_indices = @transform_3, window_bounds = array<i64: 128, 128>}, {pipeline_mode = #tpu.pipeline_mode<synchronous>, transform_indices = @transform_4, window_bounds = array<i64: 1, 128>}, {pipeline_mode = #tpu.pipeline_mode<synchronous>, transform_indices = @transform_5, window_bounds = array<i64: 1, 128>}, {pipeline_mode = #tpu.pipeline_mode<synchronous>, transform_indices = @transform_6, window_bounds = array<i64: 1, 128>}, {pipeline_mode = #tpu.pipeline_mode<synchronous>, transform_indices = @transform_7, window_bounds = array<i64: 128, 128>}, {pipeline_mode = #tpu.pipeline_mode<synchronous>, transform_indices = @transform_8, window_bounds = array<i64: 1, 128>}, {pipeline_mode = #tpu.pipeline_mode<synchronous>, transform_indices = @transform_9, window_bounds = array<i64: 128, 128>}, {pipeline_mode = #tpu.pipeline_mode<synchronous>, transform_indices = @transform_10, window_bounds = array<i64: 1, 128>}, {pipeline_mode = #tpu.pipeline_mode<synchronous>, transform_indices = @transform_11, window_bounds = array<i64: 1, 128>}, {pipeline_mode = #tpu.pipeline_mode<synchronous>, transform_indices = @transform_12, window_bounds = array<i64: 1, 128>}, {transform_indices = @transform_13, window_bounds = array<i64: 8, 128>}]} {
    %c8_i32 = arith.constant 8 : i32
    %0 = arith.muli %arg0, %c8_i32 : i32
    %1 = tpu.assume_multiple %0, 8 : i32
    %c0 = arith.constant 0 : index
    %c0_0 = arith.constant 0 : index
    %2 = vector.load %arg1[%c0, %c0_0] : memref<8x128xf32, #tpu.memory_space<vmem>>, vector<8x128xf32>
    %3 = arith.index_cast %1 : i32 to index
    %c0_1 = arith.constant 0 : index
    %4 = vector.load %arg1[%3, %c0_1] : memref<8x128xf32, #tpu.memory_space<vmem>>, vector<8x128xf32>
    %c0_2 = arith.constant 0 : index
    %c0_3 = arith.constant 0 : index
    %5 = vector.load %arg2[%c0_2, %c0_3] : memref<128x384xf32, #tpu.memory_space<vmem>>, vector<128x128xf32>
    %cst = arith.constant dense<0.000000e+00> : vector<8x128xf32>
    %6 = tpu.matmul %4, %5, %cst {dimension_numbers = #tpu.dot_dimension_numbers<[1], [0], [0], [1], [0, 0, 1, 1], [], []>} : vector<8x128xf32>, vector<128x128xf32>, vector<8x128xf32> -> vector<8x128xf32>
    %c0_4 = arith.constant 0 : index
    %c0_5 = arith.constant 0 : index
    %7 = vector.load %arg3[%c0_4, %c0_5] : memref<1x384xf32, #tpu.memory_space<vmem>>, vector<1x128xf32>
    %8 = vector.broadcast %7 : vector<1x128xf32> to vector<8x128xf32>
    %9 = arith.addf %6, %8 : vector<8x128xf32>
    %c0_6 = arith.constant 0 : index
    %c128 = arith.constant 128 : index
    %10 = vector.load %arg2[%c0_6, %c128] : memref<128x384xf32, #tpu.memory_space<vmem>>, vector<128x256xf32>
    %cst_7 = arith.constant dense<0.000000e+00> : vector<8x256xf32>
    %11 = tpu.matmul %2, %10, %cst_7 {dimension_numbers = #tpu.dot_dimension_numbers<[1], [0], [0], [1], [0, 0, 1, 1], [], []>} : vector<8x128xf32>, vector<128x256xf32>, vector<8x256xf32> -> vector<8x256xf32>
    %c0_8 = arith.constant 0 : index
    %c128_9 = arith.constant 128 : index
    %12 = vector.load %arg3[%c0_8, %c128_9] : memref<1x384xf32, #tpu.memory_space<vmem>>, vector<1x256xf32>
    %13 = vector.broadcast %12 : vector<1x256xf32> to vector<8x256xf32>
    %14 = arith.addf %11, %13 : vector<8x256xf32>
    %15 = vector.extract_strided_slice %14 {offsets = [0, 0], sizes = [8, 128], strides = [1, 1]} : vector<8x256xf32> to vector<8x128xf32>
    %16 = vector.extract_strided_slice %14 {offsets = [0, 128], sizes = [8, 128], strides = [1, 1]} : vector<8x256xf32> to vector<8x128xf32>
    %cst_10 = arith.constant 0.000000e+00 : f32
    %17 = vector.broadcast %cst_10 : f32 to vector<8x128xf32>
    %18 = vector.extract_strided_slice %9 {offsets = [0, 0], sizes = [8, 8], strides = [1, 1]} : vector<8x128xf32> to vector<8x8xf32>
    %cst_11 = arith.constant 0.353553385 : f32
    %19 = vector.broadcast %cst_11 : f32 to vector<8x8xf32>
    %20 = arith.mulf %18, %19 : vector<8x8xf32>
    %21 = vector.extract_strided_slice %15 {offsets = [0, 0], sizes = [8, 8], strides = [1, 1]} : vector<8x128xf32> to vector<8x8xf32>
    %22 = vector.extract_strided_slice %16 {offsets = [0, 0], sizes = [8, 8], strides = [1, 1]} : vector<8x128xf32> to vector<8x8xf32>
    %cst_12 = arith.constant dense<0.000000e+00> : vector<8x8xf32>
    %23 = tpu.matmul %20, %21, %cst_12 {dimension_numbers = #tpu.dot_dimension_numbers<[1], [1], [0], [0], [0, 0, 1, 0], [], []>} : vector<8x8xf32>, vector<8x8xf32>, vector<8x8xf32> -> vector<8x8xf32>
    %cst_13 = arith.constant dense<0xFF800000> : vector<8xf32>
    %24 = vector.multi_reduction <maximumf>, %23, %cst_13 [1] : vector<8x8xf32> to vector<8xf32>
    %25 = vector.shape_cast %24 : vector<8xf32> to vector<8x1xf32>
    %26 = vector.broadcast %25 : vector<8x1xf32> to vector<8x8xf32>
    %27 = arith.subf %23, %26 : vector<8x8xf32>
    %28 = math.exp %27 : vector<8x8xf32>
    %cst_14 = arith.constant dense<0.000000e+00> : vector<8xf32>
    %29 = vector.multi_reduction <add>, %28, %cst_14 [1] : vector<8x8xf32> to vector<8xf32>
    %30 = vector.shape_cast %29 : vector<8xf32> to vector<8x1xf32>
    %31 = tpu.reciprocal %30 {approx = true} : vector<8x1xf32> -> vector<8x1xf32>
    %32 = arith.mulf %30, %31 : vector<8x1xf32>
    %cst_15 = arith.constant 2.000000e+00 : f32
    %33 = vector.broadcast %cst_15 : f32 to vector<8x1xf32>
    %34 = arith.subf %33, %32 : vector<8x1xf32>
    %35 = arith.mulf %31, %34 : vector<8x1xf32>
    %cst_16 = arith.constant dense<0.000000e+00> : vector<8x8xf32>
    %36 = tpu.matmul %28, %22, %cst_16 {dimension_numbers = #tpu.dot_dimension_numbers<[1], [0], [0], [1], [0, 0, 1, 1], [], []>} : vector<8x8xf32>, vector<8x8xf32>, vector<8x8xf32> -> vector<8x8xf32>
    %37 = vector.broadcast %35 : vector<8x1xf32> to vector<8x8xf32>
    %38 = arith.mulf %36, %37 : vector<8x8xf32>
    %c0_17 = arith.constant 0 : index
    %c0_18 = arith.constant 0 : index
    %39 = vector.load %arg4[%c0_17, %c0_18] : memref<128x128xf32, #tpu.memory_space<vmem>>, vector<8x128xf32>
    %cst_19 = arith.constant dense<0.000000e+00> : vector<8x128xf32>
    %40 = tpu.matmul %38, %39, %cst_19 {dimension_numbers = #tpu.dot_dimension_numbers<[1], [0], [0], [1], [0, 0, 1, 1], [], []>} : vector<8x8xf32>, vector<8x128xf32>, vector<8x128xf32> -> vector<8x128xf32>
    %41 = arith.addf %17, %40 : vector<8x128xf32>
    %42 = vector.extract_strided_slice %9 {offsets = [0, 8], sizes = [8, 8], strides = [1, 1]} : vector<8x128xf32> to vector<8x8xf32>
    %cst_20 = arith.constant 0.353553385 : f32
    %43 = vector.broadcast %cst_20 : f32 to vector<8x8xf32>
    %44 = arith.mulf %42, %43 : vector<8x8xf32>
    %45 = vector.extract_strided_slice %15 {offsets = [0, 8], sizes = [8, 8], strides = [1, 1]} : vector<8x128xf32> to vector<8x8xf32>
    %46 = vector.extract_strided_slice %16 {offsets = [0, 8], sizes = [8, 8], strides = [1, 1]} : vector<8x128xf32> to vector<8x8xf32>
    %cst_21 = arith.constant dense<0.000000e+00> : vector<8x8xf32>
    %47 = tpu.matmul %44, %45, %cst_21 {dimension_numbers = #tpu.dot_dimension_numbers<[1], [1], [0], [0], [0, 0, 1, 0], [], []>} : vector<8x8xf32>, vector<8x8xf32>, vector<8x8xf32> -> vector<8x8xf32>
    %cst_22 = arith.constant dense<0xFF800000> : vector<8xf32>
    %48 = vector.multi_reduction <maximumf>, %47, %cst_22 [1] : vector<8x8xf32> to vector<8xf32>
    %49 = vector.shape_cast %48 : vector<8xf32> to vector<8x1xf32>
    %50 = vector.broadcast %49 : vector<8x1xf32> to vector<8x8xf32>
    %51 = arith.subf %47, %50 : vector<8x8xf32>
    %52 = math.exp %51 : vector<8x8xf32>
    %cst_23 = arith.constant dense<0.000000e+00> : vector<8xf32>
    %53 = vector.multi_reduction <add>, %52, %cst_23 [1] : vector<8x8xf32> to vector<8xf32>
    %54 = vector.shape_cast %53 : vector<8xf32> to vector<8x1xf32>
    %55 = tpu.reciprocal %54 {approx = true} : vector<8x1xf32> -> vector<8x1xf32>
    %56 = arith.mulf %54, %55 : vector<8x1xf32>
    %cst_24 = arith.constant 2.000000e+00 : f32
    %57 = vector.broadcast %cst_24 : f32 to vector<8x1xf32>
    %58 = arith.subf %57, %56 : vector<8x1xf32>
    %59 = arith.mulf %55, %58 : vector<8x1xf32>
    %cst_25 = arith.constant dense<0.000000e+00> : vector<8x8xf32>
    %60 = tpu.matmul %52, %46, %cst_25 {dimension_numbers = #tpu.dot_dimension_numbers<[1], [0], [0], [1], [0, 0, 1, 1], [], []>} : vector<8x8xf32>, vector<8x8xf32>, vector<8x8xf32> -> vector<8x8xf32>
    %61 = vector.broadcast %59 : vector<8x1xf32> to vector<8x8xf32>
    %62 = arith.mulf %60, %61 : vector<8x8xf32>
    %c8 = arith.constant 8 : index
    %c0_26 = arith.constant 0 : index
    %63 = vector.load %arg4[%c8, %c0_26] : memref<128x128xf32, #tpu.memory_space<vmem>>, vector<8x128xf32>
    %cst_27 = arith.constant dense<0.000000e+00> : vector<8x128xf32>
    %64 = tpu.matmul %62, %63, %cst_27 {dimension_numbers = #tpu.dot_dimension_numbers<[1], [0], [0], [1], [0, 0, 1, 1], [], []>} : vector<8x8xf32>, vector<8x128xf32>, vector<8x128xf32> -> vector<8x128xf32>
    %65 = arith.addf %41, %64 : vector<8x128xf32>
    %66 = vector.extract_strided_slice %9 {offsets = [0, 16], sizes = [8, 8], strides = [1, 1]} : vector<8x128xf32> to vector<8x8xf32>
    %cst_28 = arith.constant 0.353553385 : f32
    %67 = vector.broadcast %cst_28 : f32 to vector<8x8xf32>
    %68 = arith.mulf %66, %67 : vector<8x8xf32>
    %69 = vector.extract_strided_slice %15 {offsets = [0, 16], sizes = [8, 8], strides = [1, 1]} : vector<8x128xf32> to vector<8x8xf32>
    %70 = vector.extract_strided_slice %16 {offsets = [0, 16], sizes = [8, 8], strides = [1, 1]} : vector<8x128xf32> to vector<8x8xf32>
    %cst_29 = arith.constant dense<0.000000e+00> : vector<8x8xf32>
    %71 = tpu.matmul %68, %69, %cst_29 {dimension_numbers = #tpu.dot_dimension_numbers<[1], [1], [0], [0], [0, 0, 1, 0], [], []>} : vector<8x8xf32>, vector<8x8xf32>, vector<8x8xf32> -> vector<8x8xf32>
    %cst_30 = arith.constant dense<0xFF800000> : vector<8xf32>
    %72 = vector.multi_reduction <maximumf>, %71, %cst_30 [1] : vector<8x8xf32> to vector<8xf32>
    %73 = vector.shape_cast %72 : vector<8xf32> to vector<8x1xf32>
    %74 = vector.broadcast %73 : vector<8x1xf32> to vector<8x8xf32>
    %75 = arith.subf %71, %74 : vector<8x8xf32>
    %76 = math.exp %75 : vector<8x8xf32>
    %cst_31 = arith.constant dense<0.000000e+00> : vector<8xf32>
    %77 = vector.multi_reduction <add>, %76, %cst_31 [1] : vector<8x8xf32> to vector<8xf32>
    %78 = vector.shape_cast %77 : vector<8xf32> to vector<8x1xf32>
    %79 = tpu.reciprocal %78 {approx = true} : vector<8x1xf32> -> vector<8x1xf32>
    %80 = arith.mulf %78, %79 : vector<8x1xf32>
    %cst_32 = arith.constant 2.000000e+00 : f32
    %81 = vector.broadcast %cst_32 : f32 to vector<8x1xf32>
    %82 = arith.subf %81, %80 : vector<8x1xf32>
    %83 = arith.mulf %79, %82 : vector<8x1xf32>
    %cst_33 = arith.constant dense<0.000000e+00> : vector<8x8xf32>
    %84 = tpu.matmul %76, %70, %cst_33 {dimension_numbers = #tpu.dot_dimension_numbers<[1], [0], [0], [1], [0, 0, 1, 1], [], []>} : vector<8x8xf32>, vector<8x8xf32>, vector<8x8xf32> -> vector<8x8xf32>
    %85 = vector.broadcast %83 : vector<8x1xf32> to vector<8x8xf32>
    %86 = arith.mulf %84, %85 : vector<8x8xf32>
    %c16 = arith.constant 16 : index
    %c0_34 = arith.constant 0 : index
    %87 = vector.load %arg4[%c16, %c0_34] : memref<128x128xf32, #tpu.memory_space<vmem>>, vector<8x128xf32>
    %cst_35 = arith.constant dense<0.000000e+00> : vector<8x128xf32>
    %88 = tpu.matmul %86, %87, %cst_35 {dimension_numbers = #tpu.dot_dimension_numbers<[1], [0], [0], [1], [0, 0, 1, 1], [], []>} : vector<8x8xf32>, vector<8x128xf32>, vector<8x128xf32> -> vector<8x128xf32>
    %89 = arith.addf %65, %88 : vector<8x128xf32>
    %90 = vector.extract_strided_slice %9 {offsets = [0, 24], sizes = [8, 8], strides = [1, 1]} : vector<8x128xf32> to vector<8x8xf32>
    %cst_36 = arith.constant 0.353553385 : f32
    %91 = vector.broadcast %cst_36 : f32 to vector<8x8xf32>
    %92 = arith.mulf %90, %91 : vector<8x8xf32>
    %93 = vector.extract_strided_slice %15 {offsets = [0, 24], sizes = [8, 8], strides = [1, 1]} : vector<8x128xf32> to vector<8x8xf32>
    %94 = vector.extract_strided_slice %16 {offsets = [0, 24], sizes = [8, 8], strides = [1, 1]} : vector<8x128xf32> to vector<8x8xf32>
    %cst_37 = arith.constant dense<0.000000e+00> : vector<8x8xf32>
    %95 = tpu.matmul %92, %93, %cst_37 {dimension_numbers = #tpu.dot_dimension_numbers<[1], [1], [0], [0], [0, 0, 1, 0], [], []>} : vector<8x8xf32>, vector<8x8xf32>, vector<8x8xf32> -> vector<8x8xf32>
    %cst_38 = arith.constant dense<0xFF800000> : vector<8xf32>
    %96 = vector.multi_reduction <maximumf>, %95, %cst_38 [1] : vector<8x8xf32> to vector<8xf32>
    %97 = vector.shape_cast %96 : vector<8xf32> to vector<8x1xf32>
    %98 = vector.broadcast %97 : vector<8x1xf32> to vector<8x8xf32>
    %99 = arith.subf %95, %98 : vector<8x8xf32>
    %100 = math.exp %99 : vector<8x8xf32>
    %cst_39 = arith.constant dense<0.000000e+00> : vector<8xf32>
    %101 = vector.multi_reduction <add>, %100, %cst_39 [1] : vector<8x8xf32> to vector<8xf32>
    %102 = vector.shape_cast %101 : vector<8xf32> to vector<8x1xf32>
    %103 = tpu.reciprocal %102 {approx = true} : vector<8x1xf32> -> vector<8x1xf32>
    %104 = arith.mulf %102, %103 : vector<8x1xf32>
    %cst_40 = arith.constant 2.000000e+00 : f32
    %105 = vector.broadcast %cst_40 : f32 to vector<8x1xf32>
    %106 = arith.subf %105, %104 : vector<8x1xf32>
    %107 = arith.mulf %103, %106 : vector<8x1xf32>
    %cst_41 = arith.constant dense<0.000000e+00> : vector<8x8xf32>
    %108 = tpu.matmul %100, %94, %cst_41 {dimension_numbers = #tpu.dot_dimension_numbers<[1], [0], [0], [1], [0, 0, 1, 1], [], []>} : vector<8x8xf32>, vector<8x8xf32>, vector<8x8xf32> -> vector<8x8xf32>
    %109 = vector.broadcast %107 : vector<8x1xf32> to vector<8x8xf32>
    %110 = arith.mulf %108, %109 : vector<8x8xf32>
    %c24 = arith.constant 24 : index
    %c0_42 = arith.constant 0 : index
    %111 = vector.load %arg4[%c24, %c0_42] : memref<128x128xf32, #tpu.memory_space<vmem>>, vector<8x128xf32>
    %cst_43 = arith.constant dense<0.000000e+00> : vector<8x128xf32>
    %112 = tpu.matmul %110, %111, %cst_43 {dimension_numbers = #tpu.dot_dimension_numbers<[1], [0], [0], [1], [0, 0, 1, 1], [], []>} : vector<8x8xf32>, vector<8x128xf32>, vector<8x128xf32> -> vector<8x128xf32>
    %113 = arith.addf %89, %112 : vector<8x128xf32>
    %c0_44 = arith.constant 0 : index
    %c0_45 = arith.constant 0 : index
    %114 = vector.load %arg5[%c0_44, %c0_45] : memref<1x128xf32, #tpu.memory_space<vmem>>, vector<1x128xf32>
    %115 = vector.broadcast %114 : vector<1x128xf32> to vector<8x128xf32>
    %116 = arith.addf %113, %115 : vector<8x128xf32>
    %117 = tpu.iota {dimensions = array<i32: 1>} : vector<8x128xi32>
    %c32_i32 = arith.constant 32 : i32
    %118 = vector.broadcast %c32_i32 : i32 to vector<8x128xi32>
    %119 = arith.cmpi slt, %117, %118 : vector<8x128xi32>
    %120 = arith.addf %4, %116 : vector<8x128xf32>
    %c0_46 = arith.constant 0 : index
    %c0_47 = arith.constant 0 : index
    %121 = vector.load %arg6[%c0_46, %c0_47] : memref<1x128xf32, #tpu.memory_space<vmem>>, vector<1x128xf32>
    %c0_48 = arith.constant 0 : index
    %c0_49 = arith.constant 0 : index
    %122 = vector.load %arg7[%c0_48, %c0_49] : memref<1x128xf32, #tpu.memory_space<vmem>>, vector<1x128xf32>
    %cst_50 = arith.constant dense<0.000000e+00> : vector<8xf32>
    %123 = vector.multi_reduction <add>, %120, %cst_50 [1] : vector<8x128xf32> to vector<8xf32>
    %124 = vector.shape_cast %123 : vector<8xf32> to vector<8x1xf32>
    %cst_51 = arith.constant 3.125000e-02 : f32
    %125 = vector.broadcast %cst_51 : f32 to vector<8x1xf32>
    %126 = arith.mulf %124, %125 : vector<8x1xf32>
    %127 = vector.broadcast %126 : vector<8x1xf32> to vector<8x128xf32>
    %128 = arith.subf %120, %127 : vector<8x128xf32>
    %cst_52 = arith.constant 0.000000e+00 : f32
    %129 = vector.broadcast %cst_52 : f32 to vector<8x128xf32>
    %130 = arith.select %119, %128, %129 : vector<8x128xi1>, vector<8x128xf32>
    %131 = arith.mulf %130, %130 : vector<8x128xf32>
    %cst_53 = arith.constant dense<0.000000e+00> : vector<8xf32>
    %132 = vector.multi_reduction <add>, %131, %cst_53 [1] : vector<8x128xf32> to vector<8xf32>
    %133 = vector.shape_cast %132 : vector<8xf32> to vector<8x1xf32>
    %cst_54 = arith.constant 3.125000e-02 : f32
    %134 = vector.broadcast %cst_54 : f32 to vector<8x1xf32>
    %135 = arith.mulf %133, %134 : vector<8x1xf32>
    %136 = vector.broadcast %121 : vector<1x128xf32> to vector<8x128xf32>
    %137 = arith.mulf %136, %130 : vector<8x128xf32>
    %cst_55 = arith.constant 9.99999997E-7 : f32
    %138 = vector.broadcast %cst_55 : f32 to vector<8x1xf32>
    %139 = arith.addf %135, %138 : vector<8x1xf32>
    %140 = math.rsqrt %139 : vector<8x1xf32>
    %141 = vector.broadcast %140 : vector<8x1xf32> to vector<8x128xf32>
    %142 = arith.mulf %137, %141 : vector<8x128xf32>
    %143 = vector.broadcast %122 : vector<1x128xf32> to vector<8x128xf32>
    %144 = arith.addf %142, %143 : vector<8x128xf32>
    %c0_56 = arith.constant 0 : index
    %c0_57 = arith.constant 0 : index
    %145 = vector.load %arg8[%c0_56, %c0_57] : memref<128x128xf32, #tpu.memory_space<vmem>>, vector<128x128xf32>
    %cst_58 = arith.constant dense<0.000000e+00> : vector<8x128xf32>
    %146 = tpu.matmul %144, %145, %cst_58 {dimension_numbers = #tpu.dot_dimension_numbers<[1], [0], [0], [1], [0, 0, 1, 1], [], []>} : vector<8x128xf32>, vector<128x128xf32>, vector<8x128xf32> -> vector<8x128xf32>
    %c0_59 = arith.constant 0 : index
    %c0_60 = arith.constant 0 : index
    %147 = vector.load %arg9[%c0_59, %c0_60] : memref<1x128xf32, #tpu.memory_space<vmem>>, vector<1x128xf32>
    %148 = vector.broadcast %147 : vector<1x128xf32> to vector<8x128xf32>
    %149 = arith.addf %146, %148 : vector<8x128xf32>
    %cst_61 = arith.constant 0.000000e+00 : f32
    %150 = vector.broadcast %cst_61 : f32 to vector<8x128xf32>
    %151 = arith.maximumf %149, %150 : vector<8x128xf32>
    %c0_62 = arith.constant 0 : index
    %c0_63 = arith.constant 0 : index
    %152 = vector.load %arg10[%c0_62, %c0_63] : memref<128x128xf32, #tpu.memory_space<vmem>>, vector<128x128xf32>
    %cst_64 = arith.constant dense<0.000000e+00> : vector<8x128xf32>
    %153 = tpu.matmul %151, %152, %cst_64 {dimension_numbers = #tpu.dot_dimension_numbers<[1], [0], [0], [1], [0, 0, 1, 1], [], []>} : vector<8x128xf32>, vector<128x128xf32>, vector<8x128xf32> -> vector<8x128xf32>
    %c0_65 = arith.constant 0 : index
    %c0_66 = arith.constant 0 : index
    %154 = vector.load %arg11[%c0_65, %c0_66] : memref<1x128xf32, #tpu.memory_space<vmem>>, vector<1x128xf32>
    %155 = vector.broadcast %154 : vector<1x128xf32> to vector<8x128xf32>
    %156 = arith.addf %153, %155 : vector<8x128xf32>
    %157 = arith.addf %144, %156 : vector<8x128xf32>
    %c0_67 = arith.constant 0 : index
    %c0_68 = arith.constant 0 : index
    %158 = vector.load %arg12[%c0_67, %c0_68] : memref<1x128xf32, #tpu.memory_space<vmem>>, vector<1x128xf32>
    %c0_69 = arith.constant 0 : index
    %c0_70 = arith.constant 0 : index
    %159 = vector.load %arg13[%c0_69, %c0_70] : memref<1x128xf32, #tpu.memory_space<vmem>>, vector<1x128xf32>
    %cst_71 = arith.constant dense<0.000000e+00> : vector<8xf32>
    %160 = vector.multi_reduction <add>, %157, %cst_71 [1] : vector<8x128xf32> to vector<8xf32>
    %161 = vector.shape_cast %160 : vector<8xf32> to vector<8x1xf32>
    %cst_72 = arith.constant 3.125000e-02 : f32
    %162 = vector.broadcast %cst_72 : f32 to vector<8x1xf32>
    %163 = arith.mulf %161, %162 : vector<8x1xf32>
    %164 = vector.broadcast %163 : vector<8x1xf32> to vector<8x128xf32>
    %165 = arith.subf %157, %164 : vector<8x128xf32>
    %cst_73 = arith.constant 0.000000e+00 : f32
    %166 = vector.broadcast %cst_73 : f32 to vector<8x128xf32>
    %167 = arith.select %119, %165, %166 : vector<8x128xi1>, vector<8x128xf32>
    %168 = arith.mulf %167, %167 : vector<8x128xf32>
    %cst_74 = arith.constant dense<0.000000e+00> : vector<8xf32>
    %169 = vector.multi_reduction <add>, %168, %cst_74 [1] : vector<8x128xf32> to vector<8xf32>
    %170 = vector.shape_cast %169 : vector<8xf32> to vector<8x1xf32>
    %cst_75 = arith.constant 3.125000e-02 : f32
    %171 = vector.broadcast %cst_75 : f32 to vector<8x1xf32>
    %172 = arith.mulf %170, %171 : vector<8x1xf32>
    %173 = vector.broadcast %158 : vector<1x128xf32> to vector<8x128xf32>
    %174 = arith.mulf %173, %167 : vector<8x128xf32>
    %cst_76 = arith.constant 9.99999997E-7 : f32
    %175 = vector.broadcast %cst_76 : f32 to vector<8x1xf32>
    %176 = arith.addf %172, %175 : vector<8x1xf32>
    %177 = math.rsqrt %176 : vector<8x1xf32>
    %178 = vector.broadcast %177 : vector<8x1xf32> to vector<8x128xf32>
    %179 = arith.mulf %174, %178 : vector<8x128xf32>
    %180 = vector.broadcast %159 : vector<1x128xf32> to vector<8x128xf32>
    %181 = arith.addf %179, %180 : vector<8x128xf32>
    %c0_77 = arith.constant 0 : index
    %c0_78 = arith.constant 0 : index
    %182 = vector.load %arg14[%c0_77, %c0_78] : memref<8x128xf32, #tpu.memory_space<vmem>>, vector<8x128xf32>
    tpu.vector_store %arg14[%c0_77, %c0_78], %181 {strides = array<i32>} : memref<8x128xf32, #tpu.memory_space<vmem>>, vector<8x128xf32>,
    return
  }
  func.func @transform_0(%arg0: i32) -> (i32, i32) {
    %c0_i32 = arith.constant 0 : i32
    %c0_i32_0 = arith.constant 0 : i32
    %c0_i32_1 = arith.constant 0 : i32
    return %c0_i32, %c0_i32_0 : i32, i32
  }
  func.func @transform_1(%arg0: i32) -> (i32, i32) {
    %c0_i32 = arith.constant 0 : i32
    %c0_i32_0 = arith.constant 0 : i32
    %c0_i32_1 = arith.constant 0 : i32
    return %c0_i32, %c0_i32_0 : i32, i32
  }
  func.func @transform_2(%arg0: i32) -> (i32, i32) {
    %c0_i32 = arith.constant 0 : i32
    %c0_i32_0 = arith.constant 0 : i32
    %c0_i32_1 = arith.constant 0 : i32
    return %c0_i32, %c0_i32_0 : i32, i32
  }
  func.func @transform_3(%arg0: i32) -> (i32, i32) {
    %c0_i32 = arith.constant 0 : i32
    %c0_i32_0 = arith.constant 0 : i32
    %c0_i32_1 = arith.constant 0 : i32
    return %c0_i32, %c0_i32_0 : i32, i32
  }
  func.func @transform_4(%arg0: i32) -> (i32, i32) {
    %c0_i32 = arith.constant 0 : i32
    %c0_i32_0 = arith.constant 0 : i32
    %c0_i32_1 = arith.constant 0 : i32
    return %c0_i32, %c0_i32_0 : i32, i32
  }
  func.func @transform_5(%arg0: i32) -> (i32, i32) {
    %c0_i32 = arith.constant 0 : i32
    %c0_i32_0 = arith.constant 0 : i32
    %c0_i32_1 = arith.constant 0 : i32
    return %c0_i32, %c0_i32_0 : i32, i32
  }
  func.func @transform_6(%arg0: i32) -> (i32, i32) {
    %c0_i32 = arith.constant 0 : i32
    %c0_i32_0 = arith.constant 0 : i32
    %c0_i32_1 = arith.constant 0 : i32
    return %c0_i32, %c0_i32_0 : i32, i32
  }
  func.func @transform_7(%arg0: i32) -> (i32, i32) {
    %c0_i32 = arith.constant 0 : i32
    %c0_i32_0 = arith.constant 0 : i32
    %c0_i32_1 = arith.constant 0 : i32
    return %c0_i32, %c0_i32_0 : i32, i32
  }
  func.func @transform_8(%arg0: i32) -> (i32, i32) {
    %c0_i32 = arith.constant 0 : i32
    %c0_i32_0 = arith.constant 0 : i32
    %c0_i32_1 = arith.constant 0 : i32
    return %c0_i32, %c0_i32_0 : i32, i32
  }
  func.func @transform_9(%arg0: i32) -> (i32, i32) {
    %c0_i32 = arith.constant 0 : i32
    %c0_i32_0 = arith.constant 0 : i32
    %c0_i32_1 = arith.constant 0 : i32
    return %c0_i32, %c0_i32_0 : i32, i32
  }
  func.func @transform_10(%arg0: i32) -> (i32, i32) {
    %c0_i32 = arith.constant 0 : i32
    %c0_i32_0 = arith.constant 0 : i32
    %c0_i32_1 = arith.constant 0 : i32
    return %c0_i32, %c0_i32_0 : i32, i32
  }
  func.func @transform_11(%arg0: i32) -> (i32, i32) {
    %c0_i32 = arith.constant 0 : i32
    %c0_i32_0 = arith.constant 0 : i32
    %c0_i32_1 = arith.constant 0 : i32
    return %c0_i32, %c0_i32_0 : i32, i32
  }
  func.func @transform_12(%arg0: i32) -> (i32, i32) {
    %c0_i32 = arith.constant 0 : i32
    %c0_i32_0 = arith.constant 0 : i32
    %c0_i32_1 = arith.constant 0 : i32
    return %c0_i32, %c0_i32_0 : i32, i32
  }
  func.func @transform_13(%arg0: i32) -> (i32, i32) {
    %c0_i32 = arith.constant 0 : i32
    %c0_i32_0 = arith.constant 0 : i32
    return %arg0, %c0_i32 : i32, i32
  }
}

</mosaic_0001>

<llo_original>
// kernel: tpu_custom_call.1
$region0: #{tpu_custom_call.1}
  #allocation0 [shape = 'u32[]', space=smem, size = 0x4, offset = 0x4, fixed_abs, tag = 'smem constant byte address 0x4 - core index']
  #allocation1 [shape = 'u32[144,128]{1,0:T(1,128)}', space=vmem, size = 0x12000, scoped, tag = 'internal scratch']
  %s0 = inlined_call_operand.hbm [shape: f32[8,128], index: 0, kind: input, shape index: {}]
  %s1 = inlined_call_operand.hbm [shape: f32[128,384], index: 1, kind: input, shape index: {}]
  %s2 = inlined_call_operand.vmem [shape: f32[1,384], index: 2, kind: input, shape index: {}]
  %s3 = inlined_call_operand.hbm [shape: f32[128,128], index: 3, kind: input, shape index: {}]
  %s4 = inlined_call_operand.vmem [shape: f32[1,128], index: 4, kind: input, shape index: {}]
  %s5 = inlined_call_operand.vmem [shape: f32[1,128], index: 5, kind: input, shape index: {}]
  %s6 = inlined_call_operand.vmem [shape: f32[1,128], index: 6, kind: input, shape index: {}]
  %s7 = inlined_call_operand.hbm [shape: f32[128,128], index: 7, kind: input, shape index: {}]
  %s8 = inlined_call_operand.vmem [shape: f32[1,128], index: 8, kind: input, shape index: {}]
  %s9 = inlined_call_operand.hbm [shape: f32[128,128], index: 9, kind: input, shape index: {}]
  %s10 = inlined_call_operand.vmem [shape: f32[1,128], index: 10, kind: input, shape index: {}]
  %s11 = inlined_call_operand.vmem [shape: f32[1,128], index: 11, kind: input, shape index: {}]
  %s12 = inlined_call_operand.vmem [shape: f32[1,128], index: 12, kind: input, shape index: {}]
  %s13 = inlined_call_operand.hbm [shape: f32[8,128], index: 13, kind: output, shape index: {}]
  %s14 = sld [smem:[#allocation0]]
  $region82: #{tpu_custom_call.1} parent=0
    _
  %s16 = ssub.s32 1, %s14
  %s17 = scalar_select 0, %s16, %s14
  $region1: #{tpu_custom_call.1} parent=0
    #allocation2 [shape = 'u8[4096]{0}', space=vmem, size = 0x1000, scoped, tag = 'input window, operand 0, single buffered']
    #allocation3 [shape = 's32[1]{0}', space=sflag, size = 0x4, scoped, tag = 'scoped memory for tpu_custom_call.1']
    #allocation4 [shape = 's32[1]{0}', space=sflag, size = 0x4, scoped, tag = 'scoped memory for tpu_custom_call.1']
    #allocation5 [shape = 'u8[196608]{0}', space=vmem, size = 0x30000, scoped, tag = 'input window, operand 1, single buffered']
    #allocation6 [shape = 's32[1]{0}', space=sflag, size = 0x4, scoped, tag = 'scoped memory for tpu_custom_call.1']
    #allocation7 [shape = 'u8[65536]{0}', space=vmem, size = 0x10000, scoped, tag = 'input window, operand 3, single buffered']
    #allocation8 [shape = 'u8[65536]{0}', space=vmem, size = 0x10000, scoped, tag = 'input window, operand 7, single buffered']
    #allocation9 [shape = 's32[1]{0}', space=sflag, size = 0x4, scoped, tag = 'scoped memory for tpu_custom_call.1']
    #allocation10 [shape = 'u8[65536]{0}', space=vmem, size = 0x10000, scoped, tag = 'input window, operand 9, single buffered']
    #allocation11 [shape = 'u8[4096]{0}', space=vmem, size = 0x1000, scoped, tag = 'output window, operand 0, single buffered']
    %18 = vsyncpa [#allocation3], 0
    %19 = vsyncpa [#allocation6], 0
    %20 = vsyncpa [#allocation9], 0
    %21 = vsyncpa [#allocation4], 0
    // Predicated region
    $region2: #{tpu_custom_call.1} parent=1 // pred_check
      _
    $region3: #{tpu_custom_call.1} parent=1 // pred_check_branch
      %23 = sbr.rel (0) target = $region5
    $region4: #{tpu_custom_call.1} parent=1 // pred_region
      %s25 = ssub.s32 128, 128
      %26 = vsyncadd [#allocation3], %s25
      %s28 = sshll.u32 [#allocation2], 4
      %s29 = int_to_ptr.vmem [resolvable:$true] %s28
      %31 = dma.hbm_to_vmem [thread:$0]  %s0, 128, %s29, [#allocation3]
    $region5: #{tpu_custom_call.1} parent=1 // pred_fallthru
      _
    // Predicated region
    $region6: #{tpu_custom_call.1} parent=1 // pred_check
      _
    $region7: #{tpu_custom_call.1} parent=1 // pred_check_branch
      %33 = sbr.rel (0) target = $region9
    $region8: #{tpu_custom_call.1} parent=1 // pred_region
      %s35 = ssub.s32 6144, 6144
      %36 = vsyncadd [#allocation6], %s35
      %s37 = sshll.u32 [#allocation5], 4
      %s38 = int_to_ptr.vmem [resolvable:$true] %s37
      %43 = dma.hbm_to_vmem [thread:$0]  %s1, 6144, %s38, [#allocation6], 384, 384, 24
    $region9: #{tpu_custom_call.1} parent=1 // pred_fallthru
      _
    // Predicated region
    $region10: #{tpu_custom_call.1} parent=1 // pred_check
      _
    $region11: #{tpu_custom_call.1} parent=1 // pred_check_branch
      %45 = sbr.rel (0) target = $region13
    $region12: #{tpu_custom_call.1} parent=1 // pred_region
      _
    $region13: #{tpu_custom_call.1} parent=1 // pred_fallthru
      _
    // Predicated region
    $region14: #{tpu_custom_call.1} parent=1 // pred_check
      _
    $region15: #{tpu_custom_call.1} parent=1 // pred_check_branch
      %47 = sbr.rel (0) target = $region17
    $region16: #{tpu_custom_call.1} parent=1 // pred_region
      %s49 = ssub.s32 2048, 2048
      %50 = vsyncadd [#allocation6], %s49
      %s51 = sshll.u32 [#allocation7], 4
      %s52 = int_to_ptr.vmem [resolvable:$true] %s51
      %57 = dma.hbm_to_vmem [thread:$0]  %s3, 2048, %s52, [#allocation6], 128, 128, 8
    $region17: #{tpu_custom_call.1} parent=1 // pred_fallthru
      _
    // Predicated region
    $region18: #{tpu_custom_call.1} parent=1 // pred_check
      _
    $region19: #{tpu_custom_call.1} parent=1 // pred_check_branch
      %59 = sbr.rel (0) target = $region21
    $region20: #{tpu_custom_call.1} parent=1 // pred_region
      _
    $region21: #{tpu_custom_call.1} parent=1 // pred_fallthru
      _
    // Predicated region
    $region22: #{tpu_custom_call.1} parent=1 // pred_check
      _
    $region23: #{tpu_custom_call.1} parent=1 // pred_check_branch
      %61 = sbr.rel (0) target = $region25
    $region24: #{tpu_custom_call.1} parent=1 // pred_region
      _
    $region25: #{tpu_custom_call.1} parent=1 // pred_fallthru
      _
    // Predicated region
    $region26: #{tpu_custom_call.1} parent=1 // pred_check
      _
    $region27: #{tpu_custom_call.1} parent=1 // pred_check_branch
      %63 = sbr.rel (0) target = $region29
    $region28: #{tpu_custom_call.1} parent=1 // pred_region
      _
    $region29: #{tpu_custom_call.1} parent=1 // pred_fallthru
      _
    // Predicated region
    $region30: #{tpu_custom_call.1} parent=1 // pred_check
      _
    $region31: #{tpu_custom_call.1} parent=1 // pred_check_branch
      %65 = sbr.rel (0) target = $region33
    $region32: #{tpu_custom_call.1} parent=1 // pred_region
      %s67 = ssub.s32 2048, 2048
      %68 = vsyncadd [#allocation9], %s67
      %s69 = sshll.u32 [#allocation8], 4
      %s70 = int_to_ptr.vmem [resolvable:$true] %s69
      %75 = dma.hbm_to_vmem [thread:$0]  %s7, 2048, %s70, [#allocation9], 128, 128, 8
    $region33: #{tpu_custom_call.1} parent=1 // pred_fallthru
      _
    // Predicated region
    $region34: #{tpu_custom_call.1} parent=1 // pred_check
      _
    $region35: #{tpu_custom_call.1} parent=1 // pred_check_branch
      %77 = sbr.rel (0) target = $region37
    $region36: #{tpu_custom_call.1} parent=1 // pred_region
      _
    $region37: #{tpu_custom_call.1} parent=1 // pred_fallthru
      _
    // Predicated region
    $region38: #{tpu_custom_call.1} parent=1 // pred_check
      _
    $region39: #{tpu_custom_call.1} parent=1 // pred_check_branch
      %79 = sbr.rel (0) target = $region41
    $region40: #{tpu_custom_call.1} parent=1 // pred_region
      %s81 = ssub.s32 2048, 2048
      %82 = vsyncadd [#allocation9], %s81
      %s83 = sshll.u32 [#allocation10], 4
      %s84 = int_to_ptr.vmem [resolvable:$true] %s83
      %89 = dma.hbm_to_vmem [thread:$0]  %s9, 2048, %s84, [#allocation9], 128, 128, 8
    $region41: #{tpu_custom_call.1} parent=1 // pred_fallthru
      _
    // Predicated region
    $region42: #{tpu_custom_call.1} parent=1 // pred_check
      _
    $region43: #{tpu_custom_call.1} parent=1 // pred_check_branch
      %91 = sbr.rel (0) target = $region45
    $region44: #{tpu_custom_call.1} parent=1 // pred_region
      _
    $region45: #{tpu_custom_call.1} parent=1 // pred_fallthru
      _
    // Predicated region
    $region46: #{tpu_custom_call.1} parent=1 // pred_check
      _
    $region47: #{tpu_custom_call.1} parent=1 // pred_check_branch
      %93 = sbr.rel (0) target = $region49
    $region48: #{tpu_custom_call.1} parent=1 // pred_region
      _
    $region49: #{tpu_custom_call.1} parent=1 // pred_fallthru
      _
    // Predicated region
    $region50: #{tpu_custom_call.1} parent=1 // pred_check
      _
    $region51: #{tpu_custom_call.1} parent=1 // pred_check_branch
      %95 = sbr.rel (0) target = $region53
    $region52: #{tpu_custom_call.1} parent=1 // pred_region
      _
    $region53: #{tpu_custom_call.1} parent=1 // pred_fallthru
      _
    // Predicated region
    $region54: #{tpu_custom_call.1} parent=1 // pred_check
      _
    $region55: #{tpu_custom_call.1} parent=1 // pred_check_branch
      %97 = sbr.rel (0) target = $region57
    $region56: #{tpu_custom_call.1} parent=1 // pred_region
      %98 = dma.done [#allocation3], 128
    $region57: #{tpu_custom_call.1} parent=1 // pred_fallthru
      _
    // Predicated region
    $region58: #{tpu_custom_call.1} parent=1 // pred_check
      _
    $region59: #{tpu_custom_call.1} parent=1 // pred_check_branch
      %100 = sbr.rel (0) target = $region61
    $region60: #{tpu_custom_call.1} parent=1 // pred_region
      %101 = dma.done [#allocation6], 6144
    $region61: #{tpu_custom_call.1} parent=1 // pred_fallthru
      _
    // Predicated region
    $region62: #{tpu_custom_call.1} parent=1 // pred_check
      _
    $region63: #{tpu_custom_call.1} parent=1 // pred_check_branch
      %103 = sbr.rel (0) target = $region65
    $region64: #{tpu_custom_call.1} parent=1 // pred_region
      %104 = dma.done [#allocation6], 2048
    $region65: #{tpu_custom_call.1} parent=1 // pred_fallthru
      _
    // Predicated region
    $region66: #{tpu_custom_call.1} parent=1 // pred_check
      _
    $region67: #{tpu_custom_call.1} parent=1 // pred_check_branch
      %106 = sbr.rel (0) target = $region69
    $region68: #{tpu_custom_call.1} parent=1 // pred_region
      %107 = dma.done [#allocation9], 2048
    $region69: #{tpu_custom_call.1} parent=1 // pred_fallthru
      _
    // Predicated region
    $region70: #{tpu_custom_call.1} parent=1 // pred_check
      _
    $region71: #{tpu_custom_call.1} parent=1 // pred_check_branch
      %109 = sbr.rel (0) target = $region73
    $region72: #{tpu_custom_call.1} parent=1 // pred_region
      %110 = dma.done [#allocation9], 2048
    $region73: #{tpu_custom_call.1} parent=1 // pred_fallthru
      _
    %s111 = smul.u32 0, 8
    %v112 = vld [vmem:[#allocation2] sm:$0xff]
    %s113 = scalar_lea.vmem [#allocation2], %s111
    %v114 = vld [vmem:[%s113] sm:$0xff]
    %v115 = vld [vmem:[#allocation5] sm:$0xff]
    %v116 = vld [vmem:[#allocation5 + $0x18] sm:$0xff]
    %v117 = vld [vmem:[#allocation5 + $0x30] sm:$0xff]
    %v118 = vld [vmem:[#allocation5 + $0x48] sm:$0xff]
    %v119 = vld [vmem:[#allocation5 + $0x60] sm:$0xff]
    %v120 = vld [vmem:[#allocation5 + $0x78] sm:$0xff]
    %v121 = vld [vmem:[#allocation5 + $0x90] sm:$0xff]
    %v122 = vld [vmem:[#allocation5 + $0xa8] sm:$0xff]
    %v123 = vld [vmem:[#allocation5 + $0xc0] sm:$0xff]
    %v124 = vld [vmem:[#allocation5 + $0xd8] sm:$0xff]
    %v125 = vld [vmem:[#allocation5 + $0xf0] sm:$0xff]
    %v126 = vld [vmem:[#allocation5 + $0x108] sm:$0xff]
    %v127 = vld [vmem:[#allocation5 + $0x120] sm:$0xff]
    %v128 = vld [vmem:[#allocation5 + $0x138] sm:$0xff]
    %v129 = vld [vmem:[#allocation5 + $0x150] sm:$0xff]
    %v130 = vld [vmem:[#allocation5 + $0x168] sm:$0xff]
    %v131 = vld [vmem:[%s2] sm:$0x1]
    %v133 = vlaneseq
    %v134 = vshrl.u32 %v133, 7
    %v135 = vsub.s32 0, %v134
    %v136 = vrot.slane %v131, %v135
    %138 = vmatprep.subr.mxu0 0.0
    %139 = vmatpush1.msra.mxu0 %v115
    %140 = vmatprep.subr.mxu0 0.0
    %141 = vmatpush1.msra.mxu0 %v116
    %142 = vmatprep.subr.mxu0 0.0
    %143 = vmatpush1.msra.mxu0 %v117
    %144 = vmatprep.subr.mxu0 0.0
    %145 = vmatpush1.msra.mxu0 %v118
    %146 = vmatprep.subr.mxu0 0.0
    %147 = vmatpush1.msra.mxu0 %v119
    %148 = vmatprep.subr.mxu0 0.0
    %149 = vmatpush1.msra.mxu0 %v120
    %150 = vmatprep.subr.mxu0 0.0
    %151 = vmatpush1.msra.mxu0 %v121
    %152 = vmatprep.subr.mxu0 0.0
    %153 = vmatpush1.msra.mxu0 %v122
    %154 = vmatprep.subr.mxu0 0.0
    %155 = vmatpush1.msra.mxu0 %v123
    %156 = vmatprep.subr.mxu0 0.0
    %157 = vmatpush1.msra.mxu0 %v124
    %158 = vmatprep.subr.mxu0 0.0
    %159 = vmatpush1.msra.mxu0 %v125
    %160 = vmatprep.subr.mxu0 0.0
    %161 = vmatpush1.msra.mxu0 %v126
    %162 = vmatprep.subr.mxu0 0.0
    %163 = vmatpush1.msra.mxu0 %v127
    %164 = vmatprep.subr.mxu0 0.0
    %165 = vmatpush1.msra.mxu0 %v128
    %166 = vmatprep.subr.mxu0 0.0
    %167 = vmatpush1.msra.mxu0 %v129
    %168 = vmatprep.subr.mxu0 0.0
    %169 = vmatpush1.msra.mxu0 %v130
    %170 = vmatprep.subr.mxu0 0.0
    %171 = vmatpush1.msra.mxu0 0.0
    %172 = vmatprep.subr.mxu0 0.0
    %173 = vmatpush1.msra.mxu0 0.0
    %174 = vmatprep.subr.mxu0 0.0
    %175 = vmatpush1.msra.mxu0 0.0
    %176 = vmatprep.subr.mxu0 0.0
    %177 = vmatpush1.msra.mxu0 0.0
    %178 = vmatprep.subr.mxu0 0.0
    %179 = vmatpush1.msra.mxu0 0.0
    %180 = vmatprep.subr.mxu0 0.0
    %181 = vmatpush1.msra.mxu0 0.0
    %182 = vmatprep.subr.mxu0 0.0
    %183 = vmatpush1.msra.mxu0 0.0
    %184 = vmatprep.subr.mxu0 0.0
    %185 = vmatpush1.msra.mxu0 0.0
    %186 = vmatprep.subr.mxu0 0.0
    %187 = vmatpush1.msra.mxu0 0.0
    %188 = vmatprep.subr.mxu0 0.0
    %189 = vmatpush1.msra.mxu0 0.0
    %190 = vmatprep.subr.mxu0 0.0
    %191 = vmatpush1.msra.mxu0 0.0
    %192 = vmatprep.subr.mxu0 0.0
    %193 = vmatpush1.msra.mxu0 0.0
    %194 = vmatprep.subr.mxu0 0.0
    %195 = vmatpush1.msra.mxu0 0.0
    %196 = vmatprep.subr.mxu0 0.0
    %197 = vmatpush1.msra.mxu0 0.0
    %198 = vmatprep.subr.mxu0 0.0
    %199 = vmatpush1.msra.mxu0 0.0
    %200 = vmatprep.subr.mxu0 0.0
    %201 = vmatpush1.msra.mxu0 0.0
    %202 = vmatprep.mubr.f32.mxu0 0.0
    %203 = vmatmul.mubr.f32.gmra.mrb[0].mxu0 %v114
    %v204 = vpop.f32.mrb[0].mxu0
    %v205 = vadd.f32 %v136, %v204
    %v206 = vpop.f32.mrb[0].mxu0
    %207 = vdwg.mxu0
    %v208 = vld [vmem:[#allocation5 + $0x8] sm:$0xff]
    %v209 = vld [vmem:[#allocation5 + $0x10] sm:$0xff]
    %v210 = vld [vmem:[#allocation5 + $0x20] sm:$0xff]
    %v211 = vld [vmem:[#allocation5 + $0x28] sm:$0xff]
    %v212 = vld [vmem:[#allocation5 + $0x38] sm:$0xff]
    %v213 = vld [vmem:[#allocation5 + $0x40] sm:$0xff]
    %v214 = vld [vmem:[#allocation5 + $0x50] sm:$0xff]
    %v215 = vld [vmem:[#allocation5 + $0x58] sm:$0xff]
    %v216 = vld [vmem:[#allocation5 + $0x68] sm:$0xff]
    %v217 = vld [vmem:[#allocation5 + $0x70] sm:$0xff]
    %v218 = vld [vmem:[#allocation5 + $0x80] sm:$0xff]
    %v219 = vld [vmem:[#allocation5 + $0x88] sm:$0xff]
    %v220 = vld [vmem:[#allocation5 + $0x98] sm:$0xff]
    %v221 = vld [vmem:[#allocation5 + $0xa0] sm:$0xff]
    %v222 = vld [vmem:[#allocation5 + $0xb0] sm:$0xff]
    %v223 = vld [vmem:[#allocation5 + $0xb8] sm:$0xff]
    %v224 = vld [vmem:[#allocation5 + $0xc8] sm:$0xff]
    %v225 = vld [vmem:[#allocation5 + $0xd0] sm:$0xff]
    %v226 = vld [vmem:[#allocation5 + $0xe0] sm:$0xff]
    %v227 = vld [vmem:[#allocation5 + $0xe8] sm:$0xff]
    %v228 = vld [vmem:[#allocation5 + $0xf8] sm:$0xff]
    %v229 = vld [vmem:[#allocation5 + $0x100] sm:$0xff]
    %v230 = vld [vmem:[#allocation5 + $0x110] sm:$0xff]
    %v231 = vld [vmem:[#allocation5 + $0x118] sm:$0xff]
    %v232 = vld [vmem:[#allocation5 + $0x128] sm:$0xff]
    %v233 = vld [vmem:[#allocation5 + $0x130] sm:$0xff]
    %v234 = vld [vmem:[#allocation5 + $0x140] sm:$0xff]
    %v235 = vld [vmem:[#allocation5 + $0x148] sm:$0xff]
    %v236 = vld [vmem:[#allocation5 + $0x158] sm:$0xff]
    %v237 = vld [vmem:[#allocation5 + $0x160] sm:$0xff]
    %v238 = vld [vmem:[#allocation5 + $0x170] sm:$0xff]
    %v239 = vld [vmem:[#allocation5 + $0x178] sm:$0xff]
    %v240 = vld [vmem:[%s2 + $0x1] sm:$0x3]
    %v242 = vlaneseq
    %v243 = vshrl.u32 %v242, 7
    %v244 = vsub.s32 0, %v243
    %v245 = vrot.slane %v240, %v244
    %v246 = vlaneseq
    %v247 = vshrl.u32 %v246, 7
    %v248 = vsub.s32 1, %v247
    %v249 = vrot.slane %v240, %v248
    %252 = vmatprep.subr.mxu0 %v209
    %253 = vmatpush1.msra.mxu0 %v208
    %254 = vmatprep.subr.mxu0 %v211
    %255 = vmatpush1.msra.mxu0 %v210
    %256 = vmatprep.subr.mxu0 %v213
    %257 = vmatpush1.msra.mxu0 %v212
    %258 = vmatprep.subr.mxu0 %v215
    %259 = vmatpush1.msra.mxu0 %v214
    %260 = vmatprep.subr.mxu0 %v217
    %261 = vmatpush1.msra.mxu0 %v216
    %262 = vmatprep.subr.mxu0 %v219
    %263 = vmatpush1.msra.mxu0 %v218
    %264 = vmatprep.subr.mxu0 %v221
    %265 = vmatpush1.msra.mxu0 %v220
    %266 = vmatprep.subr.mxu0 %v223
    %267 = vmatpush1.msra.mxu0 %v222
    %268 = vmatprep.subr.mxu0 %v225
    %269 = vmatpush1.msra.mxu0 %v224
    %270 = vmatprep.subr.mxu0 %v227
    %271 = vmatpush1.msra.mxu0 %v226
    %272 = vmatprep.subr.mxu0 %v229
    %273 = vmatpush1.msra.mxu0 %v228
    %274 = vmatprep.subr.mxu0 %v231
    %275 = vmatpush1.msra.mxu0 %v230
    %276 = vmatprep.subr.mxu0 %v233
    %277 = vmatpush1.msra.mxu0 %v232
    %278 = vmatprep.subr.mxu0 %v235
    %279 = vmatpush1.msra.mxu0 %v234
    %280 = vmatprep.subr.mxu0 %v237
    %281 = vmatpush1.msra.mxu0 %v236
    %282 = vmatprep.subr.mxu0 %v239
    %283 = vmatpush1.msra.mxu0 %v238
    %284 = vmatprep.subr.mxu0 0.0
    %285 = vmatpush1.msra.mxu0 0.0
    %286 = vmatprep.subr.mxu0 0.0
    %287 = vmatpush1.msra.mxu0 0.0
    %288 = vmatprep.subr.mxu0 0.0
    %289 = vmatpush1.msra.mxu0 0.0
    %290 = vmatprep.subr.mxu0 0.0
    %291 = vmatpush1.msra.mxu0 0.0
    %292 = vmatprep.subr.mxu0 0.0
    %293 = vmatpush1.msra.mxu0 0.0
    %294 = vmatprep.subr.mxu0 0.0
    %295 = vmatpush1.msra.mxu0 0.0
    %296 = vmatprep.subr.mxu0 0.0
    %297 = vmatpush1.msra.mxu0 0.0
    %298 = vmatprep.subr.mxu0 0.0
    %299 = vmatpush1.msra.mxu0 0.0
    %300 = vmatprep.subr.mxu0 0.0
    %301 = vmatpush1.msra.mxu0 0.0
    %302 = vmatprep.subr.mxu0 0.0
    %303 = vmatpush1.msra.mxu0 0.0
    %304 = vmatprep.subr.mxu0 0.0
    %305 = vmatpush1.msra.mxu0 0.0
    %306 = vmatprep.subr.mxu0 0.0
    %307 = vmatpush1.msra.mxu0 0.0
    %308 = vmatprep.subr.mxu0 0.0
    %309 = vmatpush1.msra.mxu0 0.0
    %310 = vmatprep.subr.mxu0 0.0
    %311 = vmatpush1.msra.mxu0 0.0
    %312 = vmatprep.subr.mxu0 0.0
    %313 = vmatpush1.msra.mxu0 0.0
    %314 = vmatprep.subr.mxu0 0.0
    %315 = vmatpush1.msra.mxu0 0.0
    %316 = vmatprep.mubr.f32.mxu0 0.0
    %317 = vmatmul.mubr.f32.gmra.mrb[0].mxu0 %v112
    %v318 = vpop.f32.mrb[0].mxu0
    %v319 = vadd.f32 %v245, %v318
    %v320 = vpop.f32.mrb[0].mxu0
    %v321 = vadd.f32 %v249, %v320
    %322 = vdwg.mxu0
    %v323 = vmul.f32 %v205, 0.35355338
    %vm324 = vcmask 64512
    %v326 = vsel %vm324, %v323, 0
    %v329 = vsel %vm324, %v319, 0
    %331 = vmatprep.subr.mxu0 0.0
    %332 = vmatpush1.xpose.msra.mxu0 %v329
    %333 = vmatprep.subr.mxu0 0.0
    %334 = vmatpush1.xpose.msra.mxu0 0.0
    %335 = vmatprep.subr.mxu0 0.0
    %336 = vmatpush1.xpose.msra.mxu0 0.0
    %337 = vmatprep.subr.mxu0 0.0
    %338 = vmatpush1.xpose.msra.mxu0 0.0
    %339 = vmatprep.subr.mxu0 0.0
    %340 = vmatpush1.xpose.msra.mxu0 0.0
    %341 = vmatprep.subr.mxu0 0.0
    %342 = vmatpush1.xpose.msra.mxu0 0.0
    %343 = vmatprep.subr.mxu0 0.0
    %344 = vmatpush1.xpose.msra.mxu0 0.0
    %345 = vmatprep.subr.mxu0 0.0
    %346 = vmatpush1.xpose.msra.mxu0 0.0
    %347 = vmatprep.subr.mxu0 0.0
    %348 = vmatpush1.xpose.msra.mxu0 0.0
    %349 = vmatprep.subr.mxu0 0.0
    %350 = vmatpush1.xpose.msra.mxu0 0.0
    %351 = vmatprep.subr.mxu0 0.0
    %352 = vmatpush1.xpose.msra.mxu0 0.0
    %353 = vmatprep.subr.mxu0 0.0
    %354 = vmatpush1.xpose.msra.mxu0 0.0
    %355 = vmatprep.subr.mxu0 0.0
    %356 = vmatpush1.xpose.msra.mxu0 0.0
    %357 = vmatprep.subr.mxu0 0.0
    %358 = vmatpush1.xpose.msra.mxu0 0.0
    %359 = vmatprep.subr.mxu0 0.0
    %360 = vmatpush1.xpose.msra.mxu0 0.0
    %361 = vmatprep.subr.mxu0 0.0
    %362 = vmatpush1.xpose.msra.mxu0 0.0
    %363 = vmatprep.subr.mxu0 0.0
    %364 = vmatpush1.xpose.msra.mxu0 0.0
    %365 = vmatprep.subr.mxu0 0.0
    %366 = vmatpush1.xpose.msra.mxu0 0.0
    %367 = vmatprep.subr.mxu0 0.0
    %368 = vmatpush1.xpose.msra.mxu0 0.0
    %369 = vmatprep.subr.mxu0 0.0
    %370 = vmatpush1.xpose.msra.mxu0 0.0
    %371 = vmatprep.subr.mxu0 0.0
    %372 = vmatpush1.xpose.msra.mxu0 0.0
    %373 = vmatprep.subr.mxu0 0.0
    %374 = vmatpush1.xpose.msra.mxu0 0.0
    %375 = vmatprep.subr.mxu0 0.0
    %376 = vmatpush1.xpose.msra.mxu0 0.0
    %377 = vmatprep.subr.mxu0 0.0
    %378 = vmatpush1.xpose.msra.mxu0 0.0
    %379 = vmatprep.subr.mxu0 0.0
    %380 = vmatpush1.xpose.msra.mxu0 0.0
    %381 = vmatprep.subr.mxu0 0.0
    %382 = vmatpush1.xpose.msra.mxu0 0.0
    %383 = vmatprep.subr.mxu0 0.0
    %384 = vmatpush1.xpose.msra.mxu0 0.0
    %385 = vmatprep.subr.mxu0 0.0
    %386 = vmatpush1.xpose.msra.mxu0 0.0
    %387 = vmatprep.subr.mxu0 0.0
    %388 = vmatpush1.xpose.msra.mxu0 0.0
    %389 = vmatprep.subr.mxu0 0.0
    %390 = vmatpush1.xpose.msra.mxu0 0.0
    %391 = vmatprep.subr.mxu0 0.0
    %392 = vmatpush1.xpose.msra.mxu0 0.0
    %393 = vmatprep.subr.mxu0 0.0
    %394 = vmatpush1.xpose.msra.mxu0 0.0
    %395 = vmatprep.mubr.f32.mxu0 0.0
    %396 = vmatmul.mubr.f32.gmra.mrb[0].mxu0 %v326
    %v397 = vpop.f32.mrb[0].mxu0
    %v398 = vadd.f32 0.0, %v397
    %v399 = vpop.f32.mrb[0].mxu0
    %400 = vdwg.mxu0
    %v401 = vsel %vm324, %v398, -inf
    %402 = vmax.xlane.f32.xlu0 %v401
    %v403 = vpop.xlane.xlu0 %402
    %v404 = vsub.f32 %v398, %v403
    %v405 = vmul.f32 %v404, 1.442695
    %v406 = vpow.pop %v405
    %v407 = vsel %vm324, %v406, 0.0
    %408 = vadd.xlane.f32.xlu0 %v407
    %v409 = vpop.xlane.xlu0 %408
    %v410 = vrcp.pop %v409
    %v411 = vmul.f32 %v409, %v410
    %v412 = vsub.f32 2.0, %v411
    %v413 = vmul.f32 %v410, %v412
    %v415 = vsel %vm324, %v406, 0
    %417 = vmatprep.subr.mxu0 0.0
    %418 = vmatpush1.msra.mxu0 %v321
    %419 = vmatprep.subr.mxu0 0.0
    %420 = vmatpush1.msra.mxu0 0.0
    %421 = vmatprep.subr.mxu0 0.0
    %422 = vmatpush1.msra.mxu0 0.0
    %423 = vmatprep.subr.mxu0 0.0
    %424 = vmatpush1.msra.mxu0 0.0
    %425 = vmatprep.subr.mxu0 0.0
    %426 = vmatpush1.msra.mxu0 0.0
    %427 = vmatprep.subr.mxu0 0.0
    %428 = vmatpush1.msra.mxu0 0.0
    %429 = vmatprep.subr.mxu0 0.0
    %430 = vmatpush1.msra.mxu0 0.0
    %431 = vmatprep.subr.mxu0 0.0
    %432 = vmatpush1.msra.mxu0 0.0
    %433 = vmatprep.subr.mxu0 0.0
    %434 = vmatpush1.msra.mxu0 0.0
    %435 = vmatprep.subr.mxu0 0.0
    %436 = vmatpush1.msra.mxu0 0.0
    %437 = vmatprep.subr.mxu0 0.0
    %438 = vmatpush1.msra.mxu0 0.0
    %439 = vmatprep.subr.mxu0 0.0
    %440 = vmatpush1.msra.mxu0 0.0
    %441 = vmatprep.subr.mxu0 0.0
    %442 = vmatpush1.msra.mxu0 0.0
    %443 = vmatprep.subr.mxu0 0.0
    %444 = vmatpush1.msra.mxu0 0.0
    %445 = vmatprep.subr.mxu0 0.0
    %446 = vmatpush1.msra.mxu0 0.0
    %447 = vmatprep.subr.mxu0 0.0
    %448 = vmatpush1.msra.mxu0 0.0
    %449 = vmatprep.subr.mxu0 0.0
    %450 = vmatpush1.msra.mxu0 0.0
    %451 = vmatprep.subr.mxu0 0.0
    %452 = vmatpush1.msra.mxu0 0.0
    %453 = vmatprep.subr.mxu0 0.0
    %454 = vmatpush1.msra.mxu0 0.0
    %455 = vmatprep.subr.mxu0 0.0
    %456 = vmatpush1.msra.mxu0 0.0
    %457 = vmatprep.subr.mxu0 0.0
    %458 = vmatpush1.msra.mxu0 0.0
    %459 = vmatprep.subr.mxu0 0.0
    %460 = vmatpush1.msra.mxu0 0.0
    %461 = vmatprep.subr.mxu0 0.0
    %462 = vmatpush1.msra.mxu0 0.0
    %463 = vmatprep.subr.mxu0 0.0
    %464 = vmatpush1.msra.mxu0 0.0
    %465 = vmatprep.subr.mxu0 0.0
    %466 = vmatpush1.msra.mxu0 0.0
    %467 = vmatprep.subr.mxu0 0.0
    %468 = vmatpush1.msra.mxu0 0.0
    %469 = vmatprep.subr.mxu0 0.0
    %470 = vmatpush1.msra.mxu0 0.0
    %471 = vmatprep.subr.mxu0 0.0
    %472 = vmatpush1.msra.mxu0 0.0
    %473 = vmatprep.subr.mxu0 0.0
    %474 = vmatpush1.msra.mxu0 0.0
    %475 = vmatprep.subr.mxu0 0.0
    %476 = vmatpush1.msra.mxu0 0.0
    %477 = vmatprep.subr.mxu0 0.0
    %478 = vmatpush1.msra.mxu0 0.0
    %479 = vmatprep.subr.mxu0 0.0
    %480 = vmatpush1.msra.mxu0 0.0
    %481 = vmatprep.mubr.f32.mxu0 0.0
    %482 = vmatmul.mubr.f32.gmra.mrb[0].mxu0 %v415
    %v483 = vpop.f32.mrb[0].mxu0
    %v484 = vadd.f32 0.0, %v483
    %v485 = vpop.f32.mrb[0].mxu0
    %486 = vdwg.mxu0
    %v487 = vmul.f32 %v484, %v413
    %v488 = vld [vmem:[#allocation7] sm:$0xff]
    %489 = vrot.lane.b32.xlu0 %v323, 120
    %v490 = vpop.permute.xlu0 %489
    %491 = vrot.lane.b32.xlu0 %v319, 120
    %v492 = vpop.permute.xlu0 %491
    %v493 = vsel %vm324, %v490, 0
    %v495 = vsel %vm324, %v492, 0
    %497 = vmatprep.subr.mxu0 0.0
    %498 = vmatpush1.xpose.msra.mxu0 %v495
    %499 = vmatprep.subr.mxu0 0.0
    %500 = vmatpush1.xpose.msra.mxu0 0.0
    %501 = vmatprep.subr.mxu0 0.0
    %502 = vmatpush1.xpose.msra.mxu0 0.0
    %503 = vmatprep.subr.mxu0 0.0
    %504 = vmatpush1.xpose.msra.mxu0 0.0
    %505 = vmatprep.subr.mxu0 0.0
    %506 = vmatpush1.xpose.msra.mxu0 0.0
    %507 = vmatprep.subr.mxu0 0.0
    %508 = vmatpush1.xpose.msra.mxu0 0.0
    %509 = vmatprep.subr.mxu0 0.0
    %510 = vmatpush1.xpose.msra.mxu0 0.0
    %511 = vmatprep.subr.mxu0 0.0
    %512 = vmatpush1.xpose.msra.mxu0 0.0
    %513 = vmatprep.subr.mxu0 0.0
    %514 = vmatpush1.xpose.msra.mxu0 0.0
    %515 = vmatprep.subr.mxu0 0.0
    %516 = vmatpush1.xpose.msra.mxu0 0.0
    %517 = vmatprep.subr.mxu0 0.0
    %518 = vmatpush1.xpose.msra.mxu0 0.0
    %519 = vmatprep.subr.mxu0 0.0
    %520 = vmatpush1.xpose.msra.mxu0 0.0
    %521 = vmatprep.subr.mxu0 0.0
    %522 = vmatpush1.xpose.msra.mxu0 0.0
    %523 = vmatprep.subr.mxu0 0.0
    %524 = vmatpush1.xpose.msra.mxu0 0.0
    %525 = vmatprep.subr.mxu0 0.0
    %526 = vmatpush1.xpose.msra.mxu0 0.0
    %527 = vmatprep.subr.mxu0 0.0
    %528 = vmatpush1.xpose.msra.mxu0 0.0
    %529 = vmatprep.subr.mxu0 0.0
    %530 = vmatpush1.xpose.msra.mxu0 0.0
    %531 = vmatprep.subr.mxu0 0.0
    %532 = vmatpush1.xpose.msra.mxu0 0.0
    %533 = vmatprep.subr.mxu0 0.0
    %534 = vmatpush1.xpose.msra.mxu0 0.0
    %535 = vmatprep.subr.mxu0 0.0
    %536 = vmatpush1.xpose.msra.mxu0 0.0
    %537 = vmatprep.subr.mxu0 0.0
    %538 = vmatpush1.xpose.msra.mxu0 0.0
    %539 = vmatprep.subr.mxu0 0.0
    %540 = vmatpush1.xpose.msra.mxu0 0.0
    %541 = vmatprep.subr.mxu0 0.0
    %542 = vmatpush1.xpose.msra.mxu0 0.0
    %543 = vmatprep.subr.mxu0 0.0
    %544 = vmatpush1.xpose.msra.mxu0 0.0
    %545 = vmatprep.subr.mxu0 0.0
    %546 = vmatpush1.xpose.msra.mxu0 0.0
    %547 = vmatprep.subr.mxu0 0.0
    %548 = vmatpush1.xpose.msra.mxu0 0.0
    %549 = vmatprep.subr.mxu0 0.0
    %550 = vmatpush1.xpose.msra.mxu0 0.0
    %551 = vmatprep.subr.mxu0 0.0
    %552 = vmatpush1.xpose.msra.mxu0 0.0
    %553 = vmatprep.subr.mxu0 0.0
    %554 = vmatpush1.xpose.msra.mxu0 0.0
    %555 = vmatprep.subr.mxu0 0.0
    %556 = vmatpush1.xpose.msra.mxu0 0.0
    %557 = vmatprep.subr.mxu0 0.0
    %558 = vmatpush1.xpose.msra.mxu0 0.0
    %559 = vmatprep.subr.mxu0 0.0
    %560 = vmatpush1.xpose.msra.mxu0 0.0
    %561 = vmatprep.mubr.f32.mxu0 0.0
    %562 = vmatmul.mubr.f32.gmra.mrb[0].mxu0 %v493
    %v563 = vpop.f32.mrb[0].mxu0
    %v564 = vadd.f32 0.0, %v563
    %v565 = vpop.f32.mrb[0].mxu0
    %566 = vdwg.mxu0
    %v567 = vsel %vm324, %v564, -inf
    %568 = vmax.xlane.f32.xlu0 %v567
    %v569 = vpop.xlane.xlu0 %568
    %v570 = vsub.f32 %v564, %v569
    %v571 = vmul.f32 %v570, 1.442695
    %v572 = vpow.pop %v571
    %v573 = vsel %vm324, %v572, 0.0
    %574 = vadd.xlane.f32.xlu0 %v573
    %v575 = vpop.xlane.xlu0 %574
    %v576 = vrcp.pop %v575
    %v577 = vmul.f32 %v575, %v576
    %v578 = vsub.f32 2.0, %v577
    %v579 = vmul.f32 %v576, %v578
    %581 = vrot.lane.b32.xlu0 %v321, 120
    %v582 = vpop.permute.xlu0 %581
    %v585 = vsel %vm324, %v572, 0
    %587 = vmatprep.subr.mxu0 0.0
    %588 = vmatpush1.msra.mxu0 %v582
    %589 = vmatprep.subr.mxu0 0.0
    %590 = vmatpush1.msra.mxu0 0.0
    %591 = vmatprep.subr.mxu0 0.0
    %592 = vmatpush1.msra.mxu0 0.0
    %593 = vmatprep.subr.mxu0 0.0
    %594 = vmatpush1.msra.mxu0 0.0
    %595 = vmatprep.subr.mxu0 0.0
    %596 = vmatpush1.msra.mxu0 0.0
    %597 = vmatprep.subr.mxu0 0.0
    %598 = vmatpush1.msra.mxu0 0.0
    %599 = vmatprep.subr.mxu0 0.0
    %600 = vmatpush1.msra.mxu0 0.0
    %601 = vmatprep.subr.mxu0 0.0
    %602 = vmatpush1.msra.mxu0 0.0
    %603 = vmatprep.subr.mxu0 0.0
    %604 = vmatpush1.msra.mxu0 0.0
    %605 = vmatprep.subr.mxu0 0.0
    %606 = vmatpush1.msra.mxu0 0.0
    %607 = vmatprep.subr.mxu0 0.0
    %608 = vmatpush1.msra.mxu0 0.0
    %609 = vmatprep.subr.mxu0 0.0
    %610 = vmatpush1.msra.mxu0 0.0
    %611 = vmatprep.subr.mxu0 0.0
    %612 = vmatpush1.msra.mxu0 0.0
    %613 = vmatprep.subr.mxu0 0.0
    %614 = vmatpush1.msra.mxu0 0.0
    %615 = vmatprep.subr.mxu0 0.0
    %616 = vmatpush1.msra.mxu0 0.0
    %617 = vmatprep.subr.mxu0 0.0
    %618 = vmatpush1.msra.mxu0 0.0
    %619 = vmatprep.subr.mxu0 0.0
    %620 = vmatpush1.msra.mxu0 0.0
    %621 = vmatprep.subr.mxu0 0.0
    %622 = vmatpush1.msra.mxu0 0.0
    %623 = vmatprep.subr.mxu0 0.0
    %624 = vmatpush1.msra.mxu0 0.0
    %625 = vmatprep.subr.mxu0 0.0
    %626 = vmatpush1.msra.mxu0 0.0
    %627 = vmatprep.subr.mxu0 0.0
    %628 = vmatpush1.msra.mxu0 0.0
    %629 = vmatprep.subr.mxu0 0.0
    %630 = vmatpush1.msra.mxu0 0.0
    %631 = vmatprep.subr.mxu0 0.0
    %632 = vmatpush1.msra.mxu0 0.0
    %633 = vmatprep.subr.mxu0 0.0
    %634 = vmatpush1.msra.mxu0 0.0
    %635 = vmatprep.subr.mxu0 0.0
    %636 = vmatpush1.msra.mxu0 0.0
    %637 = vmatprep.subr.mxu0 0.0
    %638 = vmatpush1.msra.mxu0 0.0
    %639 = vmatprep.subr.mxu0 0.0
    %640 = vmatpush1.msra.mxu0 0.0
    %641 = vmatprep.subr.mxu0 0.0
    %642 = vmatpush1.msra.mxu0 0.0
    %643 = vmatprep.subr.mxu0 0.0
    %644 = vmatpush1.msra.mxu0 0.0
    %645 = vmatprep.subr.mxu0 0.0
    %646 = vmatpush1.msra.mxu0 0.0
    %647 = vmatprep.subr.mxu0 0.0
    %648 = vmatpush1.msra.mxu0 0.0
    %649 = vmatprep.subr.mxu0 0.0
    %650 = vmatpush1.msra.mxu0 0.0
    %651 = vmatprep.mubr.f32.mxu0 0.0
    %652 = vmatmul.mubr.f32.gmra.mrb[0].mxu0 %v585
    %v653 = vpop.f32.mrb[0].mxu0
    %v654 = vadd.f32 0.0, %v653
    %v655 = vpop.f32.mrb[0].mxu0
    %656 = vdwg.mxu0
    %v657 = vmul.f32 %v654, %v579
    %v658 = vld [vmem:[#allocation7 + $0x8] sm:$0xff]
    %v660 = vsel %vm324, %v657, 0
    %662 = vmatprep.subr.mxu0 0.0
    %663 = vmatpush1.msra.mxu0 %v658
    %664 = vmatprep.subr.mxu0 0.0
    %665 = vmatpush1.msra.mxu0 0.0
    %666 = vmatprep.subr.mxu0 0.0
    %667 = vmatpush1.msra.mxu0 0.0
    %668 = vmatprep.subr.mxu0 0.0
    %669 = vmatpush1.msra.mxu0 0.0
    %670 = vmatprep.subr.mxu0 0.0
    %671 = vmatpush1.msra.mxu0 0.0
    %672 = vmatprep.subr.mxu0 0.0
    %673 = vmatpush1.msra.mxu0 0.0
    %674 = vmatprep.subr.mxu0 0.0
    %675 = vmatpush1.msra.mxu0 0.0
    %676 = vmatprep.subr.mxu0 0.0
    %677 = vmatpush1.msra.mxu0 0.0
    %678 = vmatprep.subr.mxu0 0.0
    %679 = vmatpush1.msra.mxu0 0.0
    %680 = vmatprep.subr.mxu0 0.0
    %681 = vmatpush1.msra.mxu0 0.0
    %682 = vmatprep.subr.mxu0 0.0
    %683 = vmatpush1.msra.mxu0 0.0
    %684 = vmatprep.subr.mxu0 0.0
    %685 = vmatpush1.msra.mxu0 0.0
    %686 = vmatprep.subr.mxu0 0.0
    %687 = vmatpush1.msra.mxu0 0.0
    %688 = vmatprep.subr.mxu0 0.0
    %689 = vmatpush1.msra.mxu0 0.0
    %690 = vmatprep.subr.mxu0 0.0
    %691 = vmatpush1.msra.mxu0 0.0
    %692 = vmatprep.subr.mxu0 0.0
    %693 = vmatpush1.msra.mxu0 0.0
    %694 = vmatprep.subr.mxu0 0.0
    %695 = vmatpush1.msra.mxu0 0.0
    %696 = vmatprep.subr.mxu0 0.0
    %697 = vmatpush1.msra.mxu0 0.0
    %698 = vmatprep.subr.mxu0 0.0
    %699 = vmatpush1.msra.mxu0 0.0
    %700 = vmatprep.subr.mxu0 0.0
    %701 = vmatpush1.msra.mxu0 0.0
    %702 = vmatprep.subr.mxu0 0.0
    %703 = vmatpush1.msra.mxu0 0.0
    %704 = vmatprep.subr.mxu0 0.0
    %705 = vmatpush1.msra.mxu0 0.0
    %706 = vmatprep.subr.mxu0 0.0
    %707 = vmatpush1.msra.mxu0 0.0
    %708 = vmatprep.subr.mxu0 0.0
    %709 = vmatpush1.msra.mxu0 0.0
    %710 = vmatprep.subr.mxu0 0.0
    %711 = vmatpush1.msra.mxu0 0.0
    %712 = vmatprep.subr.mxu0 0.0
    %713 = vmatpush1.msra.mxu0 0.0
    %714 = vmatprep.subr.mxu0 0.0
    %715 = vmatpush1.msra.mxu0 0.0
    %716 = vmatprep.subr.mxu0 0.0
    %717 = vmatpush1.msra.mxu0 0.0
    %718 = vmatprep.subr.mxu0 0.0
    %719 = vmatpush1.msra.mxu0 0.0
    %720 = vmatprep.subr.mxu0 0.0
    %721 = vmatpush1.msra.mxu0 0.0
    %722 = vmatprep.subr.mxu0 0.0
    %723 = vmatpush1.msra.mxu0 0.0
    %724 = vmatprep.subr.mxu0 0.0
    %725 = vmatpush1.msra.mxu0 0.0
    %726 = vmatprep.mubr.f32.mxu0 0.0
    %727 = vmatmul.mubr.f32.gmra.mrb[0].mxu0 %v660
    %v728 = vpop.f32.mrb[0].mxu0
    %v729 = vadd.f32 0.0, %v728
    %v730 = vpop.f32.mrb[0].mxu0
    %731 = vdwg.mxu0
    %v733 = vsel %vm324, %v487, 0
    %735 = vmatprep.subr.mxu0 0.0
    %736 = vmatpush1.msra.mxu0 %v488
    %737 = vmatprep.subr.mxu0 0.0
    %738 = vmatpush1.msra.mxu0 0.0
    %739 = vmatprep.subr.mxu0 0.0
    %740 = vmatpush1.msra.mxu0 0.0
    %741 = vmatprep.subr.mxu0 0.0
    %742 = vmatpush1.msra.mxu0 0.0
    %743 = vmatprep.subr.mxu0 0.0
    %744 = vmatpush1.msra.mxu0 0.0
    %745 = vmatprep.subr.mxu0 0.0
    %746 = vmatpush1.msra.mxu0 0.0
    %747 = vmatprep.subr.mxu0 0.0
    %748 = vmatpush1.msra.mxu0 0.0
    %749 = vmatprep.subr.mxu0 0.0
    %750 = vmatpush1.msra.mxu0 0.0
    %751 = vmatprep.subr.mxu0 0.0
    %752 = vmatpush1.msra.mxu0 0.0
    %753 = vmatprep.subr.mxu0 0.0
    %754 = vmatpush1.msra.mxu0 0.0
    %755 = vmatprep.subr.mxu0 0.0
    %756 = vmatpush1.msra.mxu0 0.0
    %757 = vmatprep.subr.mxu0 0.0
    %758 = vmatpush1.msra.mxu0 0.0
    %759 = vmatprep.subr.mxu0 0.0
    %760 = vmatpush1.msra.mxu0 0.0
    %761 = vmatprep.subr.mxu0 0.0
    %762 = vmatpush1.msra.mxu0 0.0
    %763 = vmatprep.subr.mxu0 0.0
    %764 = vmatpush1.msra.mxu0 0.0
    %765 = vmatprep.subr.mxu0 0.0
    %766 = vmatpush1.msra.mxu0 0.0
    %767 = vmatprep.subr.mxu0 0.0
    %768 = vmatpush1.msra.mxu0 0.0
    %769 = vmatprep.subr.mxu0 0.0
    %770 = vmatpush1.msra.mxu0 0.0
    %771 = vmatprep.subr.mxu0 0.0
    %772 = vmatpush1.msra.mxu0 0.0
    %773 = vmatprep.subr.mxu0 0.0
    %774 = vmatpush1.msra.mxu0 0.0
    %775 = vmatprep.subr.mxu0 0.0
    %776 = vmatpush1.msra.mxu0 0.0
    %777 = vmatprep.subr.mxu0 0.0
    %778 = vmatpush1.msra.mxu0 0.0
    %779 = vmatprep.subr.mxu0 0.0
    %780 = vmatpush1.msra.mxu0 0.0
    %781 = vmatprep.subr.mxu0 0.0
    %782 = vmatpush1.msra.mxu0 0.0
    %783 = vmatprep.subr.mxu0 0.0
    %784 = vmatpush1.msra.mxu0 0.0
    %785 = vmatprep.subr.mxu0 0.0
    %786 = vmatpush1.msra.mxu0 0.0
    %787 = vmatprep.subr.mxu0 0.0
    %788 = vmatpush1.msra.mxu0 0.0
    %789 = vmatprep.subr.mxu0 0.0
    %790 = vmatpush1.msra.mxu0 0.0
    %791 = vmatprep.subr.mxu0 0.0
    %792 = vmatpush1.msra.mxu0 0.0
    %793 = vmatprep.subr.mxu0 0.0
    %794 = vmatpush1.msra.mxu0 0.0
    %795 = vmatprep.subr.mxu0 0.0
    %796 = vmatpush1.msra.mxu0 0.0
    %797 = vmatprep.subr.mxu0 0.0
    %798 = vmatpush1.msra.mxu0 0.0
    %799 = vmatprep.mubr.f32.mxu0 0.0
    %800 = vmatmul.mubr.f32.gmra.mrb[0].mxu0 %v733
    %v801 = vpop.f32.mrb[0].mxu0
    %v802 = vadd.f32 %v729, %v801
    %v803 = vpop.f32.mrb[0].mxu0
    %804 = vdwg.mxu0
    %805 = vrot.lane.b32.xlu0 %v323, 112
    %v806 = vpop.permute.xlu0 %805
    %807 = vrot.lane.b32.xlu0 %v319, 112
    %v808 = vpop.permute.xlu0 %807
    %v809 = vsel %vm324, %v806, 0
    %v811 = vsel %vm324, %v808, 0
    %813 = vmatprep.subr.mxu0 0.0
    %814 = vmatpush1.xpose.msra.mxu0 %v811
    %815 = vmatprep.subr.mxu0 0.0
    %816 = vmatpush1.xpose.msra.mxu0 0.0
    %817 = vmatprep.subr.mxu0 0.0
    %818 = vmatpush1.xpose.msra.mxu0 0.0
    %819 = vmatprep.subr.mxu0 0.0
    %820 = vmatpush1.xpose.msra.mxu0 0.0
    %821 = vmatprep.subr.mxu0 0.0
    %822 = vmatpush1.xpose.msra.mxu0 0.0
    %823 = vmatprep.subr.mxu0 0.0
    %824 = vmatpush1.xpose.msra.mxu0 0.0
    %825 = vmatprep.subr.mxu0 0.0
    %826 = vmatpush1.xpose.msra.mxu0 0.0
    %827 = vmatprep.subr.mxu0 0.0
    %828 = vmatpush1.xpose.msra.mxu0 0.0
    %829 = vmatprep.subr.mxu0 0.0
    %830 = vmatpush1.xpose.msra.mxu0 0.0
    %831 = vmatprep.subr.mxu0 0.0
    %832 = vmatpush1.xpose.msra.mxu0 0.0
    %833 = vmatprep.subr.mxu0 0.0
    %834 = vmatpush1.xpose.msra.mxu0 0.0
    %835 = vmatprep.subr.mxu0 0.0
    %836 = vmatpush1.xpose.msra.mxu0 0.0
    %837 = vmatprep.subr.mxu0 0.0
    %838 = vmatpush1.xpose.msra.mxu0 0.0
    %839 = vmatprep.subr.mxu0 0.0
    %840 = vmatpush1.xpose.msra.mxu0 0.0
    %841 = vmatprep.subr.mxu0 0.0
    %842 = vmatpush1.xpose.msra.mxu0 0.0
    %843 = vmatprep.subr.mxu0 0.0
    %844 = vmatpush1.xpose.msra.mxu0 0.0
    %845 = vmatprep.subr.mxu0 0.0
    %846 = vmatpush1.xpose.msra.mxu0 0.0
    %847 = vmatprep.subr.mxu0 0.0
    %848 = vmatpush1.xpose.msra.mxu0 0.0
    %849 = vmatprep.subr.mxu0 0.0
    %850 = vmatpush1.xpose.msra.mxu0 0.0
    %851 = vmatprep.subr.mxu0 0.0
    %852 = vmatpush1.xpose.msra.mxu0 0.0
    %853 = vmatprep.subr.mxu0 0.0
    %854 = vmatpush1.xpose.msra.mxu0 0.0
    %855 = vmatprep.subr.mxu0 0.0
    %856 = vmatpush1.xpose.msra.mxu0 0.0
    %857 = vmatprep.subr.mxu0 0.0
    %858 = vmatpush1.xpose.msra.mxu0 0.0
    %859 = vmatprep.subr.mxu0 0.0
    %860 = vmatpush1.xpose.msra.mxu0 0.0
    %861 = vmatprep.subr.mxu0 0.0
    %862 = vmatpush1.xpose.msra.mxu0 0.0
    %863 = vmatprep.subr.mxu0 0.0
    %864 = vmatpush1.xpose.msra.mxu0 0.0
    %865 = vmatprep.subr.mxu0 0.0
    %866 = vmatpush1.xpose.msra.mxu0 0.0
    %867 = vmatprep.subr.mxu0 0.0
    %868 = vmatpush1.xpose.msra.mxu0 0.0
    %869 = vmatprep.subr.mxu0 0.0
    %870 = vmatpush1.xpose.msra.mxu0 0.0
    %871 = vmatprep.subr.mxu0 0.0
    %872 = vmatpush1.xpose.msra.mxu0 0.0
    %873 = vmatprep.subr.mxu0 0.0
    %874 = vmatpush1.xpose.msra.mxu0 0.0
    %875 = vmatprep.subr.mxu0 0.0
    %876 = vmatpush1.xpose.msra.mxu0 0.0
    %877 = vmatprep.mubr.f32.mxu0 0.0
    %878 = vmatmul.mubr.f32.gmra.mrb[0].mxu0 %v809
    %v879 = vpop.f32.mrb[0].mxu0
    %v880 = vadd.f32 0.0, %v879
    %v881 = vpop.f32.mrb[0].mxu0
    %882 = vdwg.mxu0
    %v883 = vsel %vm324, %v880, -inf
    %884 = vmax.xlane.f32.xlu0 %v883
    %v885 = vpop.xlane.xlu0 %884
    %v886 = vsub.f32 %v880, %v885
    %v887 = vmul.f32 %v886, 1.442695
    %v888 = vpow.pop %v887
    %v889 = vsel %vm324, %v888, 0.0
    %890 = vadd.xlane.f32.xlu0 %v889
    %v891 = vpop.xlane.xlu0 %890
    %v892 = vrcp.pop %v891
    %v893 = vmul.f32 %v891, %v892
    %v894 = vsub.f32 2.0, %v893
    %v895 = vmul.f32 %v892, %v894
    %896 = vrot.lane.b32.xlu0 %v321, 112
    %v897 = vpop.permute.xlu0 %896
    %v900 = vsel %vm324, %v888, 0
    %902 = vmatprep.subr.mxu0 0.0
    %903 = vmatpush1.msra.mxu0 %v897
    %904 = vmatprep.subr.mxu0 0.0
    %905 = vmatpush1.msra.mxu0 0.0
    %906 = vmatprep.subr.mxu0 0.0
    %907 = vmatpush1.msra.mxu0 0.0
    %908 = vmatprep.subr.mxu0 0.0
    %909 = vmatpush1.msra.mxu0 0.0
    %910 = vmatprep.subr.mxu0 0.0
    %911 = vmatpush1.msra.mxu0 0.0
    %912 = vmatprep.subr.mxu0 0.0
    %913 = vmatpush1.msra.mxu0 0.0
    %914 = vmatprep.subr.mxu0 0.0
    %915 = vmatpush1.msra.mxu0 0.0
    %916 = vmatprep.subr.mxu0 0.0
    %917 = vmatpush1.msra.mxu0 0.0
    %918 = vmatprep.subr.mxu0 0.0
    %919 = vmatpush1.msra.mxu0 0.0
    %920 = vmatprep.subr.mxu0 0.0
    %921 = vmatpush1.msra.mxu0 0.0
    %922 = vmatprep.subr.mxu0 0.0
    %923 = vmatpush1.msra.mxu0 0.0
    %924 = vmatprep.subr.mxu0 0.0
    %925 = vmatpush1.msra.mxu0 0.0
    %926 = vmatprep.subr.mxu0 0.0
    %927 = vmatpush1.msra.mxu0 0.0
    %928 = vmatprep.subr.mxu0 0.0
    %929 = vmatpush1.msra.mxu0 0.0
    %930 = vmatprep.subr.mxu0 0.0
    %931 = vmatpush1.msra.mxu0 0.0
    %932 = vmatprep.subr.mxu0 0.0
    %933 = vmatpush1.msra.mxu0 0.0
    %934 = vmatprep.subr.mxu0 0.0
    %935 = vmatpush1.msra.mxu0 0.0
    %936 = vmatprep.subr.mxu0 0.0
    %937 = vmatpush1.msra.mxu0 0.0
    %938 = vmatprep.subr.mxu0 0.0
    %939 = vmatpush1.msra.mxu0 0.0
    %940 = vmatprep.subr.mxu0 0.0
    %941 = vmatpush1.msra.mxu0 0.0
    %942 = vmatprep.subr.mxu0 0.0
    %943 = vmatpush1.msra.mxu0 0.0
    %944 = vmatprep.subr.mxu0 0.0
    %945 = vmatpush1.msra.mxu0 0.0
    %946 = vmatprep.subr.mxu0 0.0
    %947 = vmatpush1.msra.mxu0 0.0
    %948 = vmatprep.subr.mxu0 0.0
    %949 = vmatpush1.msra.mxu0 0.0
    %950 = vmatprep.subr.mxu0 0.0
    %951 = vmatpush1.msra.mxu0 0.0
    %952 = vmatprep.subr.mxu0 0.0
    %953 = vmatpush1.msra.mxu0 0.0
    %954 = vmatprep.subr.mxu0 0.0
    %955 = vmatpush1.msra.mxu0 0.0
    %956 = vmatprep.subr.mxu0 0.0
    %957 = vmatpush1.msra.mxu0 0.0
    %958 = vmatprep.subr.mxu0 0.0
    %959 = vmatpush1.msra.mxu0 0.0
    %960 = vmatprep.subr.mxu0 0.0
    %961 = vmatpush1.msra.mxu0 0.0
    %962 = vmatprep.subr.mxu0 0.0
    %963 = vmatpush1.msra.mxu0 0.0
    %964 = vmatprep.subr.mxu0 0.0
    %965 = vmatpush1.msra.mxu0 0.0
    %966 = vmatprep.mubr.f32.mxu0 0.0
    %967 = vmatmul.mubr.f32.gmra.mrb[0].mxu0 %v900
    %v968 = vpop.f32.mrb[0].mxu0
    %v969 = vadd.f32 0.0, %v968
    %v970 = vpop.f32.mrb[0].mxu0
    %971 = vdwg.mxu0
    %v972 = vmul.f32 %v969, %v895
    %v973 = vld [vmem:[#allocation7 + $0x10] sm:$0xff]
    %v975 = vsel %vm324, %v972, 0
    %977 = vmatprep.subr.mxu0 0.0
    %978 = vmatpush1.msra.mxu0 %v973
    %979 = vmatprep.subr.mxu0 0.0
    %980 = vmatpush1.msra.mxu0 0.0
    %981 = vmatprep.subr.mxu0 0.0
    %982 = vmatpush1.msra.mxu0 0.0
    %983 = vmatprep.subr.mxu0 0.0
    %984 = vmatpush1.msra.mxu0 0.0
    %985 = vmatprep.subr.mxu0 0.0
    %986 = vmatpush1.msra.mxu0 0.0
    %987 = vmatprep.subr.mxu0 0.0
    %988 = vmatpush1.msra.mxu0 0.0
    %989 = vmatprep.subr.mxu0 0.0
    %990 = vmatpush1.msra.mxu0 0.0
    %991 = vmatprep.subr.mxu0 0.0
    %992 = vmatpush1.msra.mxu0 0.0
    %993 = vmatprep.subr.mxu0 0.0
    %994 = vmatpush1.msra.mxu0 0.0
    %995 = vmatprep.subr.mxu0 0.0
    %996 = vmatpush1.msra.mxu0 0.0
    %997 = vmatprep.subr.mxu0 0.0
    %998 = vmatpush1.msra.mxu0 0.0
    %999 = vmatprep.subr.mxu0 0.0
    %1000 = vmatpush1.msra.mxu0 0.0
    %1001 = vmatprep.subr.mxu0 0.0
    %1002 = vmatpush1.msra.mxu0 0.0
    %1003 = vmatprep.subr.mxu0 0.0
    %1004 = vmatpush1.msra.mxu0 0.0
    %1005 = vmatprep.subr.mxu0 0.0
    %1006 = vmatpush1.msra.mxu0 0.0
    %1007 = vmatprep.subr.mxu0 0.0
    %1008 = vmatpush1.msra.mxu0 0.0
    %1009 = vmatprep.subr.mxu0 0.0
    %1010 = vmatpush1.msra.mxu0 0.0
    %1011 = vmatprep.subr.mxu0 0.0
    %1012 = vmatpush1.msra.mxu0 0.0
    %1013 = vmatprep.subr.mxu0 0.0
    %1014 = vmatpush1.msra.mxu0 0.0
    %1015 = vmatprep.subr.mxu0 0.0
    %1016 = vmatpush1.msra.mxu0 0.0
    %1017 = vmatprep.subr.mxu0 0.0
    %1018 = vmatpush1.msra.mxu0 0.0
    %1019 = vmatprep.subr.mxu0 0.0
    %1020 = vmatpush1.msra.mxu0 0.0
    %1021 = vmatprep.subr.mxu0 0.0
    %1022 = vmatpush1.msra.mxu0 0.0
    %1023 = vmatprep.subr.mxu0 0.0
    %1024 = vmatpush1.msra.mxu0 0.0
    %1025 = vmatprep.subr.mxu0 0.0
    %1026 = vmatpush1.msra.mxu0 0.0
    %1027 = vmatprep.subr.mxu0 0.0
    %1028 = vmatpush1.msra.mxu0 0.0
    %1029 = vmatprep.subr.mxu0 0.0
    %1030 = vmatpush1.msra.mxu0 0.0
    %1031 = vmatprep.subr.mxu0 0.0
    %1032 = vmatpush1.msra.mxu0 0.0
    %1033 = vmatprep.subr.mxu0 0.0
    %1034 = vmatpush1.msra.mxu0 0.0
    %1035 = vmatprep.subr.mxu0 0.0
    %1036 = vmatpush1.msra.mxu0 0.0
    %1037 = vmatprep.subr.mxu0 0.0
    %1038 = vmatpush1.msra.mxu0 0.0
    %1039 = vmatprep.subr.mxu0 0.0
    %1040 = vmatpush1.msra.mxu0 0.0
    %1041 = vmatprep.mubr.f32.mxu0 0.0
    %1042 = vmatmul.mubr.f32.gmra.mrb[0].mxu0 %v975
    %v1043 = vpop.f32.mrb[0].mxu0
    %v1044 = vadd.f32 0.0, %v1043
    %v1045 = vpop.f32.mrb[0].mxu0
    %1046 = vdwg.mxu0
    %v1047 = vadd.f32 %v802, %v1044
    %1048 = vrot.lane.b32.xlu0 %v323, 104
    %v1049 = vpop.permute.xlu0 %1048
    %1050 = vrot.lane.b32.xlu0 %v319, 104
    %v1051 = vpop.permute.xlu0 %1050
    %v1052 = vsel %vm324, %v1049, 0
    %v1054 = vsel %vm324, %v1051, 0
    %1056 = vmatprep.subr.mxu0 0.0
    %1057 = vmatpush1.xpose.msra.mxu0 %v1054
    %1058 = vmatprep.subr.mxu0 0.0
    %1059 = vmatpush1.xpose.msra.mxu0 0.0
    %1060 = vmatprep.subr.mxu0 0.0
    %1061 = vmatpush1.xpose.msra.mxu0 0.0
    %1062 = vmatprep.subr.mxu0 0.0
    %1063 = vmatpush1.xpose.msra.mxu0 0.0
    %1064 = vmatprep.subr.mxu0 0.0
    %1065 = vmatpush1.xpose.msra.mxu0 0.0
    %1066 = vmatprep.subr.mxu0 0.0
    %1067 = vmatpush1.xpose.msra.mxu0 0.0
    %1068 = vmatprep.subr.mxu0 0.0
    %1069 = vmatpush1.xpose.msra.mxu0 0.0
    %1070 = vmatprep.subr.mxu0 0.0
    %1071 = vmatpush1.xpose.msra.mxu0 0.0
    %1072 = vmatprep.subr.mxu0 0.0
    %1073 = vmatpush1.xpose.msra.mxu0 0.0
    %1074 = vmatprep.subr.mxu0 0.0
    %1075 = vmatpush1.xpose.msra.mxu0 0.0
    %1076 = vmatprep.subr.mxu0 0.0
    %1077 = vmatpush1.xpose.msra.mxu0 0.0
    %1078 = vmatprep.subr.mxu0 0.0
    %1079 = vmatpush1.xpose.msra.mxu0 0.0
    %1080 = vmatprep.subr.mxu0 0.0
    %1081 = vmatpush1.xpose.msra.mxu0 0.0
    %1082 = vmatprep.subr.mxu0 0.0
    %1083 = vmatpush1.xpose.msra.mxu0 0.0
    %1084 = vmatprep.subr.mxu0 0.0
    %1085 = vmatpush1.xpose.msra.mxu0 0.0
    %1086 = vmatprep.subr.mxu0 0.0
    %1087 = vmatpush1.xpose.msra.mxu0 0.0
    %1088 = vmatprep.subr.mxu0 0.0
    %1089 = vmatpush1.xpose.msra.mxu0 0.0
    %1090 = vmatprep.subr.mxu0 0.0
    %1091 = vmatpush1.xpose.msra.mxu0 0.0
    %1092 = vmatprep.subr.mxu0 0.0
    %1093 = vmatpush1.xpose.msra.mxu0 0.0
    %1094 = vmatprep.subr.mxu0 0.0
    %1095 = vmatpush1.xpose.msra.mxu0 0.0
    %1096 = vmatprep.subr.mxu0 0.0
    %1097 = vmatpush1.xpose.msra.mxu0 0.0
    %1098 = vmatprep.subr.mxu0 0.0
    %1099 = vmatpush1.xpose.msra.mxu0 0.0
    %1100 = vmatprep.subr.mxu0 0.0
    %1101 = vmatpush1.xpose.msra.mxu0 0.0
    %1102 = vmatprep.subr.mxu0 0.0
    %1103 = vmatpush1.xpose.msra.mxu0 0.0
    %1104 = vmatprep.subr.mxu0 0.0
    %1105 = vmatpush1.xpose.msra.mxu0 0.0
    %1106 = vmatprep.subr.mxu0 0.0
    %1107 = vmatpush1.xpose.msra.mxu0 0.0
    %1108 = vmatprep.subr.mxu0 0.0
    %1109 = vmatpush1.xpose.msra.mxu0 0.0
    %1110 = vmatprep.subr.mxu0 0.0
    %1111 = vmatpush1.xpose.msra.mxu0 0.0
    %1112 = vmatprep.subr.mxu0 0.0
    %1113 = vmatpush1.xpose.msra.mxu0 0.0
    %1114 = vmatprep.subr.mxu0 0.0
    %1115 = vmatpush1.xpose.msra.mxu0 0.0
    %1116 = vmatprep.subr.mxu0 0.0
    %1117 = vmatpush1.xpose.msra.mxu0 0.0
    %1118 = vmatprep.subr.mxu0 0.0
    %1119 = vmatpush1.xpose.msra.mxu0 0.0
    %1120 = vmatprep.mubr.f32.mxu0 0.0
    %1121 = vmatmul.mubr.f32.gmra.mrb[0].mxu0 %v1052
    %v1122 = vpop.f32.mrb[0].mxu0
    %v1123 = vadd.f32 0.0, %v1122
    %v1124 = vpop.f32.mrb[0].mxu0
    %1125 = vdwg.mxu0
    %v1126 = vsel %vm324, %v1123, -inf
    %1127 = vmax.xlane.f32.xlu0 %v1126
    %v1128 = vpop.xlane.xlu0 %1127
    %v1129 = vsub.f32 %v1123, %v1128
    %v1130 = vmul.f32 %v1129, 1.442695
    %v1131 = vpow.pop %v1130
    %v1132 = vsel %vm324, %v1131, 0.0
    %1133 = vadd.xlane.f32.xlu0 %v1132
    %v1134 = vpop.xlane.xlu0 %1133
    %v1135 = vrcp.pop %v1134
    %v1136 = vmul.f32 %v1134, %v1135
    %v1137 = vsub.f32 2.0, %v1136
    %v1138 = vmul.f32 %v1135, %v1137
    %1139 = vrot.lane.b32.xlu0 %v321, 104
    %v1140 = vpop.permute.xlu0 %1139
    %v1143 = vsel %vm324, %v1131, 0
    %1145 = vmatprep.subr.mxu0 0.0
    %1146 = vmatpush1.msra.mxu0 %v1140
    %1147 = vmatprep.subr.mxu0 0.0
    %1148 = vmatpush1.msra.mxu0 0.0
    %1149 = vmatprep.subr.mxu0 0.0
    %1150 = vmatpush1.msra.mxu0 0.0
    %1151 = vmatprep.subr.mxu0 0.0
    %1152 = vmatpush1.msra.mxu0 0.0
    %1153 = vmatprep.subr.mxu0 0.0
    %1154 = vmatpush1.msra.mxu0 0.0
    %1155 = vmatprep.subr.mxu0 0.0
    %1156 = vmatpush1.msra.mxu0 0.0
    %1157 = vmatprep.subr.mxu0 0.0
    %1158 = vmatpush1.msra.mxu0 0.0
    %1159 = vmatprep.subr.mxu0 0.0
    %1160 = vmatpush1.msra.mxu0 0.0
    %1161 = vmatprep.subr.mxu0 0.0
    %1162 = vmatpush1.msra.mxu0 0.0
    %1163 = vmatprep.subr.mxu0 0.0
    %1164 = vmatpush1.msra.mxu0 0.0
    %1165 = vmatprep.subr.mxu0 0.0
    %1166 = vmatpush1.msra.mxu0 0.0
    %1167 = vmatprep.subr.mxu0 0.0
    %1168 = vmatpush1.msra.mxu0 0.0
    %1169 = vmatprep.subr.mxu0 0.0
    %1170 = vmatpush1.msra.mxu0 0.0
    %1171 = vmatprep.subr.mxu0 0.0
    %1172 = vmatpush1.msra.mxu0 0.0
    %1173 = vmatprep.subr.mxu0 0.0
    %1174 = vmatpush1.msra.mxu0 0.0
    %1175 = vmatprep.subr.mxu0 0.0
    %1176 = vmatpush1.msra.mxu0 0.0
    %1177 = vmatprep.subr.mxu0 0.0
    %1178 = vmatpush1.msra.mxu0 0.0
    %1179 = vmatprep.subr.mxu0 0.0
    %1180 = vmatpush1.msra.mxu0 0.0
    %1181 = vmatprep.subr.mxu0 0.0
    %1182 = vmatpush1.msra.mxu0 0.0
    %1183 = vmatprep.subr.mxu0 0.0
    %1184 = vmatpush1.msra.mxu0 0.0
    %1185 = vmatprep.subr.mxu0 0.0
    %1186 = vmatpush1.msra.mxu0 0.0
    %1187 = vmatprep.subr.mxu0 0.0
    %1188 = vmatpush1.msra.mxu0 0.0
    %1189 = vmatprep.subr.mxu0 0.0
    %1190 = vmatpush1.msra.mxu0 0.0
    %1191 = vmatprep.subr.mxu0 0.0
    %1192 = vmatpush1.msra.mxu0 0.0
    %1193 = vmatprep.subr.mxu0 0.0
    %1194 = vmatpush1.msra.mxu0 0.0
    %1195 = vmatprep.subr.mxu0 0.0
    %1196 = vmatpush1.msra.mxu0 0.0
    %1197 = vmatprep.subr.mxu0 0.0
    %1198 = vmatpush1.msra.mxu0 0.0
    %1199 = vmatprep.subr.mxu0 0.0
    %1200 = vmatpush1.msra.mxu0 0.0
    %1201 = vmatprep.subr.mxu0 0.0
    %1202 = vmatpush1.msra.mxu0 0.0
    %1203 = vmatprep.subr.mxu0 0.0
    %1204 = vmatpush1.msra.mxu0 0.0
    %1205 = vmatprep.subr.mxu0 0.0
    %1206 = vmatpush1.msra.mxu0 0.0
    %1207 = vmatprep.subr.mxu0 0.0
    %1208 = vmatpush1.msra.mxu0 0.0
    %1209 = vmatprep.mubr.f32.mxu0 0.0
    %1210 = vmatmul.mubr.f32.gmra.mrb[0].mxu0 %v1143
    %v1211 = vpop.f32.mrb[0].mxu0
    %v1212 = vadd.f32 0.0, %v1211
    %v1213 = vpop.f32.mrb[0].mxu0
    %1214 = vdwg.mxu0
    %v1215 = vmul.f32 %v1212, %v1138
    %v1216 = vld [vmem:[#allocation7 + $0x18] sm:$0xff]
    %v1218 = vsel %vm324, %v1215, 0
    %1220 = vmatprep.subr.mxu0 0.0
    %1221 = vmatpush1.msra.mxu0 %v1216
    %1222 = vmatprep.subr.mxu0 0.0
    %1223 = vmatpush1.msra.mxu0 0.0
    %1224 = vmatprep.subr.mxu0 0.0
    %1225 = vmatpush1.msra.mxu0 0.0
    %1226 = vmatprep.subr.mxu0 0.0
    %1227 = vmatpush1.msra.mxu0 0.0
    %1228 = vmatprep.subr.mxu0 0.0
    %1229 = vmatpush1.msra.mxu0 0.0
    %1230 = vmatprep.subr.mxu0 0.0
    %1231 = vmatpush1.msra.mxu0 0.0
    %1232 = vmatprep.subr.mxu0 0.0
    %1233 = vmatpush1.msra.mxu0 0.0
    %1234 = vmatprep.subr.mxu0 0.0
    %1235 = vmatpush1.msra.mxu0 0.0
    %1236 = vmatprep.subr.mxu0 0.0
    %1237 = vmatpush1.msra.mxu0 0.0
    %1238 = vmatprep.subr.mxu0 0.0
    %1239 = vmatpush1.msra.mxu0 0.0
    %1240 = vmatprep.subr.mxu0 0.0
    %1241 = vmatpush1.msra.mxu0 0.0
    %1242 = vmatprep.subr.mxu0 0.0
    %1243 = vmatpush1.msra.mxu0 0.0
    %1244 = vmatprep.subr.mxu0 0.0
    %1245 = vmatpush1.msra.mxu0 0.0
    %1246 = vmatprep.subr.mxu0 0.0
    %1247 = vmatpush1.msra.mxu0 0.0
    %1248 = vmatprep.subr.mxu0 0.0
    %1249 = vmatpush1.msra.mxu0 0.0
    %1250 = vmatprep.subr.mxu0 0.0
    %1251 = vmatpush1.msra.mxu0 0.0
    %1252 = vmatprep.subr.mxu0 0.0
    %1253 = vmatpush1.msra.mxu0 0.0
    %1254 = vmatprep.subr.mxu0 0.0
    %1255 = vmatpush1.msra.mxu0 0.0
    %1256 = vmatprep.subr.mxu0 0.0
    %1257 = vmatpush1.msra.mxu0 0.0
    %1258 = vmatprep.subr.mxu0 0.0
    %1259 = vmatpush1.msra.mxu0 0.0
    %1260 = vmatprep.subr.mxu0 0.0
    %1261 = vmatpush1.msra.mxu0 0.0
    %1262 = vmatprep.subr.mxu0 0.0
    %1263 = vmatpush1.msra.mxu0 0.0
    %1264 = vmatprep.subr.mxu0 0.0
    %1265 = vmatpush1.msra.mxu0 0.0
    %1266 = vmatprep.subr.mxu0 0.0
    %1267 = vmatpush1.msra.mxu0 0.0
    %1268 = vmatprep.subr.mxu0 0.0
    %1269 = vmatpush1.msra.mxu0 0.0
    %1270 = vmatprep.subr.mxu0 0.0
    %1271 = vmatpush1.msra.mxu0 0.0
    %1272 = vmatprep.subr.mxu0 0.0
    %1273 = vmatpush1.msra.mxu0 0.0
    %1274 = vmatprep.subr.mxu0 0.0
    %1275 = vmatpush1.msra.mxu0 0.0
    %1276 = vmatprep.subr.mxu0 0.0
    %1277 = vmatpush1.msra.mxu0 0.0
    %1278 = vmatprep.subr.mxu0 0.0
    %1279 = vmatpush1.msra.mxu0 0.0
    %1280 = vmatprep.subr.mxu0 0.0
    %1281 = vmatpush1.msra.mxu0 0.0
    %1282 = vmatprep.subr.mxu0 0.0
    %1283 = vmatpush1.msra.mxu0 0.0
    %1284 = vmatprep.mubr.f32.mxu0 0.0
    %1285 = vmatmul.mubr.f32.gmra.mrb[0].mxu0 %v1218
    %v1286 = vpop.f32.mrb[0].mxu0
    %v1287 = vadd.f32 0.0, %v1286
    %v1288 = vpop.f32.mrb[0].mxu0
    %1289 = vdwg.mxu0
    %v1290 = vadd.f32 %v1047, %v1287
    %v1291 = vld [vmem:[%s4] sm:$0x1]
    %v1293 = vlaneseq
    %v1294 = vshrl.u32 %v1293, 7
    %v1295 = vsub.s32 0, %v1294
    %v1296 = vrot.slane %v1291, %v1295
    %v1298 = vadd.f32 %v1290, %v1296
    %v1299 = vlaneseq
    %v1300 = vand.u32 %v1299, 127
    %vm1301 = vcmp.lt.s32.totalorder %v1300, 32
    %v1302 = vadd.f32 %v114, %v1298
    %v1303 = vld [vmem:[%s5] sm:$0x1]
    %v1304 = vld [vmem:[%s6] sm:$0x1]
    %1305 = vadd.xlane.f32.xlu0 %v1302
    %v1306 = vpop.xlane.xlu0 %1305
    %v1307 = vmul.f32 %v1306, 0.03125
    %v1308 = vsub.f32 %v1302, %v1307
    %v1309 = vsel %vm1301, %v1308, 0.0
    %v1310 = vmul.f32 %v1309, %v1309
    %1311 = vadd.xlane.f32.xlu0 %v1310
    %v1312 = vpop.xlane.xlu0 %1311
    %v1313 = vmul.f32 %v1312, 0.03125
    %v1315 = vlaneseq
    %v1316 = vshrl.u32 %v1315, 7
    %v1317 = vsub.s32 0, %v1316
    %v1318 = vrot.slane %v1303, %v1317
    %v1320 = vmul.f32 %v1318, %v1309
    %v1321 = vadd.f32 %v1313, 1e-06
    %v1322 = vrsqrt.pop %v1321
    %v1323 = vmul.f32 %v1320, %v1322
    %v1325 = vlaneseq
    %v1326 = vshrl.u32 %v1325, 7
    %v1327 = vsub.s32 0, %v1326
    %v1328 = vrot.slane %v1304, %v1327
    %v1330 = vadd.f32 %v1323, %v1328
    %v1331 = vld [vmem:[#allocation8] sm:$0xff]
    %v1332 = vld [vmem:[#allocation8 + $0x8] sm:$0xff]
    %v1333 = vld [vmem:[#allocation8 + $0x10] sm:$0xff]
    %v1334 = vld [vmem:[#allocation8 + $0x18] sm:$0xff]
    %v1335 = vld [vmem:[#allocation8 + $0x20] sm:$0xff]
    %v1336 = vld [vmem:[#allocation8 + $0x28] sm:$0xff]
    %v1337 = vld [vmem:[#allocation8 + $0x30] sm:$0xff]
    %v1338 = vld [vmem:[#allocation8 + $0x38] sm:$0xff]
    %v1339 = vld [vmem:[#allocation8 + $0x40] sm:$0xff]
    %v1340 = vld [vmem:[#allocation8 + $0x48] sm:$0xff]
    %v1341 = vld [vmem:[#allocation8 + $0x50] sm:$0xff]
    %v1342 = vld [vmem:[#allocation8 + $0x58] sm:$0xff]
    %v1343 = vld [vmem:[#allocation8 + $0x60] sm:$0xff]
    %v1344 = vld [vmem:[#allocation8 + $0x68] sm:$0xff]
    %v1345 = vld [vmem:[#allocation8 + $0x70] sm:$0xff]
    %v1346 = vld [vmem:[#allocation8 + $0x78] sm:$0xff]
    %v1347 = vld [vmem:[%s8] sm:$0x1]
    %v1349 = vlaneseq
    %v1350 = vshrl.u32 %v1349, 7
    %v1351 = vsub.s32 0, %v1350
    %v1352 = vrot.slane %v1347, %v1351
    %1354 = vmatprep.subr.mxu0 0.0
    %1355 = vmatpush1.msra.mxu0 %v1331
    %1356 = vmatprep.subr.mxu0 0.0
    %1357 = vmatpush1.msra.mxu0 %v1332
    %1358 = vmatprep.subr.mxu0 0.0
    %1359 = vmatpush1.msra.mxu0 %v1333
    %1360 = vmatprep.subr.mxu0 0.0
    %1361 = vmatpush1.msra.mxu0 %v1334
    %1362 = vmatprep.subr.mxu0 0.0
    %1363 = vmatpush1.msra.mxu0 %v1335
    %1364 = vmatprep.subr.mxu0 0.0
    %1365 = vmatpush1.msra.mxu0 %v1336
    %1366 = vmatprep.subr.mxu0 0.0
    %1367 = vmatpush1.msra.mxu0 %v1337
    %1368 = vmatprep.subr.mxu0 0.0
    %1369 = vmatpush1.msra.mxu0 %v1338
    %1370 = vmatprep.subr.mxu0 0.0
    %1371 = vmatpush1.msra.mxu0 %v1339
    %1372 = vmatprep.subr.mxu0 0.0
    %1373 = vmatpush1.msra.mxu0 %v1340
    %1374 = vmatprep.subr.mxu0 0.0
    %1375 = vmatpush1.msra.mxu0 %v1341
    %1376 = vmatprep.subr.mxu0 0.0
    %1377 = vmatpush1.msra.mxu0 %v1342
    %1378 = vmatprep.subr.mxu0 0.0
    %1379 = vmatpush1.msra.mxu0 %v1343
    %1380 = vmatprep.subr.mxu0 0.0
    %1381 = vmatpush1.msra.mxu0 %v1344
    %1382 = vmatprep.subr.mxu0 0.0
    %1383 = vmatpush1.msra.mxu0 %v1345
    %1384 = vmatprep.subr.mxu0 0.0
    %1385 = vmatpush1.msra.mxu0 %v1346
    %1386 = vmatprep.subr.mxu0 0.0
    %1387 = vmatpush1.msra.mxu0 0.0
    %1388 = vmatprep.subr.mxu0 0.0
    %1389 = vmatpush1.msra.mxu0 0.0
    %1390 = vmatprep.subr.mxu0 0.0
    %1391 = vmatpush1.msra.mxu0 0.0
    %1392 = vmatprep.subr.mxu0 0.0
    %1393 = vmatpush1.msra.mxu0 0.0
    %1394 = vmatprep.subr.mxu0 0.0
    %1395 = vmatpush1.msra.mxu0 0.0
    %1396 = vmatprep.subr.mxu0 0.0
    %1397 = vmatpush1.msra.mxu0 0.0
    %1398 = vmatprep.subr.mxu0 0.0
    %1399 = vmatpush1.msra.mxu0 0.0
    %1400 = vmatprep.subr.mxu0 0.0
    %1401 = vmatpush1.msra.mxu0 0.0
    %1402 = vmatprep.subr.mxu0 0.0
    %1403 = vmatpush1.msra.mxu0 0.0
    %1404 = vmatprep.subr.mxu0 0.0
    %1405 = vmatpush1.msra.mxu0 0.0
    %1406 = vmatprep.subr.mxu0 0.0
    %1407 = vmatpush1.msra.mxu0 0.0
    %1408 = vmatprep.subr.mxu0 0.0
    %1409 = vmatpush1.msra.mxu0 0.0
    %1410 = vmatprep.subr.mxu0 0.0
    %1411 = vmatpush1.msra.mxu0 0.0
    %1412 = vmatprep.subr.mxu0 0.0
    %1413 = vmatpush1.msra.mxu0 0.0
    %1414 = vmatprep.subr.mxu0 0.0
    %1415 = vmatpush1.msra.mxu0 0.0
    %1416 = vmatprep.subr.mxu0 0.0
    %1417 = vmatpush1.msra.mxu0 0.0
    %1418 = vmatprep.mubr.f32.mxu0 0.0
    %1419 = vmatmul.mubr.f32.gmra.mrb[0].mxu0 %v1330
    %v1420 = vpop.f32.mrb[0].mxu0
    %v1421 = vadd.f32 %v1352, %v1420
    %v1422 = vpop.f32.mrb[0].mxu0
    %1423 = vdwg.mxu0
    %v1424 = vmax.f32 %v1421, 0.0
    %v1425 = vld [vmem:[#allocation10] sm:$0xff]
    %v1426 = vld [vmem:[#allocation10 + $0x8] sm:$0xff]
    %v1427 = vld [vmem:[#allocation10 + $0x10] sm:$0xff]
    %v1428 = vld [vmem:[#allocation10 + $0x18] sm:$0xff]
    %v1429 = vld [vmem:[#allocation10 + $0x20] sm:$0xff]
    %v1430 = vld [vmem:[#allocation10 + $0x28] sm:$0xff]
    %v1431 = vld [vmem:[#allocation10 + $0x30] sm:$0xff]
    %v1432 = vld [vmem:[#allocation10 + $0x38] sm:$0xff]
    %v1433 = vld [vmem:[#allocation10 + $0x40] sm:$0xff]
    %v1434 = vld [vmem:[#allocation10 + $0x48] sm:$0xff]
    %v1435 = vld [vmem:[#allocation10 + $0x50] sm:$0xff]
    %v1436 = vld [vmem:[#allocation10 + $0x58] sm:$0xff]
    %v1437 = vld [vmem:[#allocation10 + $0x60] sm:$0xff]
    %v1438 = vld [vmem:[#allocation10 + $0x68] sm:$0xff]
    %v1439 = vld [vmem:[#allocation10 + $0x70] sm:$0xff]
    %v1440 = vld [vmem:[#allocation10 + $0x78] sm:$0xff]
    %v1441 = vld [vmem:[%s10] sm:$0x1]
    %v1443 = vlaneseq
    %v1444 = vshrl.u32 %v1443, 7
    %v1445 = vsub.s32 0, %v1444
    %v1446 = vrot.slane %v1441, %v1445
    %1448 = vmatprep.subr.mxu0 0.0
    %1449 = vmatpush1.msra.mxu0 %v1425
    %1450 = vmatprep.subr.mxu0 0.0
    %1451 = vmatpush1.msra.mxu0 %v1426
    %1452 = vmatprep.subr.mxu0 0.0
    %1453 = vmatpush1.msra.mxu0 %v1427
    %1454 = vmatprep.subr.mxu0 0.0
    %1455 = vmatpush1.msra.mxu0 %v1428
    %1456 = vmatprep.subr.mxu0 0.0
    %1457 = vmatpush1.msra.mxu0 %v1429
    %1458 = vmatprep.subr.mxu0 0.0
    %1459 = vmatpush1.msra.mxu0 %v1430
    %1460 = vmatprep.subr.mxu0 0.0
    %1461 = vmatpush1.msra.mxu0 %v1431
    %1462 = vmatprep.subr.mxu0 0.0
    %1463 = vmatpush1.msra.mxu0 %v1432
    %1464 = vmatprep.subr.mxu0 0.0
    %1465 = vmatpush1.msra.mxu0 %v1433
    %1466 = vmatprep.subr.mxu0 0.0
    %1467 = vmatpush1.msra.mxu0 %v1434
    %1468 = vmatprep.subr.mxu0 0.0
    %1469 = vmatpush1.msra.mxu0 %v1435
    %1470 = vmatprep.subr.mxu0 0.0
    %1471 = vmatpush1.msra.mxu0 %v1436
    %1472 = vmatprep.subr.mxu0 0.0
    %1473 = vmatpush1.msra.mxu0 %v1437
    %1474 = vmatprep.subr.mxu0 0.0
    %1475 = vmatpush1.msra.mxu0 %v1438
    %1476 = vmatprep.subr.mxu0 0.0
    %1477 = vmatpush1.msra.mxu0 %v1439
    %1478 = vmatprep.subr.mxu0 0.0
    %1479 = vmatpush1.msra.mxu0 %v1440
    %1480 = vmatprep.subr.mxu0 0.0
    %1481 = vmatpush1.msra.mxu0 0.0
    %1482 = vmatprep.subr.mxu0 0.0
    %1483 = vmatpush1.msra.mxu0 0.0
    %1484 = vmatprep.subr.mxu0 0.0
    %1485 = vmatpush1.msra.mxu0 0.0
    %1486 = vmatprep.subr.mxu0 0.0
    %1487 = vmatpush1.msra.mxu0 0.0
    %1488 = vmatprep.subr.mxu0 0.0
    %1489 = vmatpush1.msra.mxu0 0.0
    %1490 = vmatprep.subr.mxu0 0.0
    %1491 = vmatpush1.msra.mxu0 0.0
    %1492 = vmatprep.subr.mxu0 0.0
    %1493 = vmatpush1.msra.mxu0 0.0
    %1494 = vmatprep.subr.mxu0 0.0
    %1495 = vmatpush1.msra.mxu0 0.0
    %1496 = vmatprep.subr.mxu0 0.0
    %1497 = vmatpush1.msra.mxu0 0.0
    %1498 = vmatprep.subr.mxu0 0.0
    %1499 = vmatpush1.msra.mxu0 0.0
    %1500 = vmatprep.subr.mxu0 0.0
    %1501 = vmatpush1.msra.mxu0 0.0
    %1502 = vmatprep.subr.mxu0 0.0
    %1503 = vmatpush1.msra.mxu0 0.0
    %1504 = vmatprep.subr.mxu0 0.0
    %1505 = vmatpush1.msra.mxu0 0.0
    %1506 = vmatprep.subr.mxu0 0.0
    %1507 = vmatpush1.msra.mxu0 0.0
    %1508 = vmatprep.subr.mxu0 0.0
    %1509 = vmatpush1.msra.mxu0 0.0
    %1510 = vmatprep.subr.mxu0 0.0
    %1511 = vmatpush1.msra.mxu0 0.0
    %1512 = vmatprep.mubr.f32.mxu0 0.0
    %1513 = vmatmul.mubr.f32.gmra.mrb[0].mxu0 %v1424
    %v1514 = vpop.f32.mrb[0].mxu0
    %v1515 = vadd.f32 %v1446, %v1514
    %v1516 = vpop.f32.mrb[0].mxu0
    %1517 = vdwg.mxu0
    %v1518 = vadd.f32 %v1330, %v1515
    %v1519 = vld [vmem:[%s11] sm:$0x1]
    %v1520 = vld [vmem:[%s12] sm:$0x1]
    %1521 = vadd.xlane.f32.xlu0 %v1518
    %v1522 = vpop.xlane.xlu0 %1521
    %v1523 = vmul.f32 %v1522, 0.03125
    %v1524 = vsub.f32 %v1518, %v1523
    %v1525 = vsel %vm1301, %v1524, 0.0
    %v1526 = vmul.f32 %v1525, %v1525
    %1527 = vadd.xlane.f32.xlu0 %v1526
    %v1528 = vpop.xlane.xlu0 %1527
    %v1529 = vmul.f32 %v1528, 0.03125
    %v1531 = vlaneseq
    %v1532 = vshrl.u32 %v1531, 7
    %v1533 = vsub.s32 0, %v1532
    %v1534 = vrot.slane %v1519, %v1533
    %v1536 = vmul.f32 %v1534, %v1525
    %v1537 = vadd.f32 %v1529, 1e-06
    %v1538 = vrsqrt.pop %v1537
    %v1539 = vmul.f32 %v1536, %v1538
    %v1541 = vlaneseq
    %v1542 = vshrl.u32 %v1541, 7
    %v1543 = vsub.s32 0, %v1542
    %v1544 = vrot.slane %v1520, %v1543
    %v1546 = vadd.f32 %v1539, %v1544
    %1547 = vst [vmem:[#allocation11] sm:$0xff] %v1546
    // Predicated region
    $region74: #{tpu_custom_call.1} parent=1 // pred_check
      _
    $region75: #{tpu_custom_call.1} parent=1 // pred_check_branch
      %1549 = sbr.rel (0) target = $region77
    $region76: #{tpu_custom_call.1} parent=1 // pred_region
      %s1551 = ssub.s32 128, 128
      %1552 = vsyncadd [#allocation4], %s1551
      %s1554 = sshll.u32 [#allocation11], 4
      %s1555 = int_to_ptr.vmem [resolvable:$true] %s1554
      %1557 = dma.vmem_to_hbm [thread:$0]  %s1555, 128, %s13, [#allocation4]
    $region77: #{tpu_custom_call.1} parent=1 // pred_fallthru
      _
    // Predicated region
    $region78: #{tpu_custom_call.1} parent=1 // pred_check
      _
    $region79: #{tpu_custom_call.1} parent=1 // pred_check_branch
      %1559 = sbr.rel (0) target = $region81
    $region80: #{tpu_custom_call.1} parent=1 // pred_region
      %1560 = dma.done [#allocation4], 128
    $region81: #{tpu_custom_call.1} parent=1 // pred_fallthru
      _
    %1561 = vsyncpa [#allocation3], 1
    %1562 = vsyncpa [#allocation6], 1
    %1563 = vsyncpa [#allocation9], 1
    %1564 = vsyncpa [#allocation4], 1

</llo_original>
